<compile_context>
chip_gen: v6e
topology: v6e:2x2x1
jax: 0.10.0
libtpu: 0.0.40
codegen_flags: <defaults>
</compile_context>

<pallas_src>
import jax
import jax.numpy as jnp
from jax.experimental import pallas as pl
from jax.experimental.pallas import tpu as pltpu


# ----------------------------- Pallas kernel -----------------------------
def _make_kernel(b_blk, seq_len, d_model, n_head, d_k, d_v, temperature, eps,
                 return_attn):
    inv_temp = 1.0 / float(temperature)
    m_rows = b_blk * seq_len
    bf16 = jnp.bfloat16

    def kernel(qx_ref, kx_ref, vx_ref,
               wq_ref, bq_ref, wk_ref, bk_ref, wv_ref, bv_ref,
               wfc_ref, bfc_ref, gamma_ref, beta_ref,
               out_ref, *attn_refs):
        # Flatten (B_blk, L, D) -> (B_blk*L, D): leading/sublane-dim merge,
        # layout no-op (last dim unchanged).
        xq = qx_ref[...].reshape(m_rows, d_model)   # f32, kept for residual
        xk = kx_ref[...].reshape(m_rows, d_model)
        xv = vx_ref[...].reshape(m_rows, d_model)

        # Q/K/V projections as three tall matmuls: bf16 MXU inputs, f32 acc.
        Q = jnp.dot(xq.astype(bf16), wq_ref[...],
                    preferred_element_type=jnp.float32) + bq_ref[...]
        K = jnp.dot(xk.astype(bf16), wk_ref[...],
                    preferred_element_type=jnp.float32) + bk_ref[...]
        V = jnp.dot(xv.astype(bf16), wv_ref[...],
                    preferred_element_type=jnp.float32) + bv_ref[...]
        Q = Q * inv_temp                            # q / temperature

        # Cast ONCE (not per head) and restore the (b, L, features) view.
        Qb = Q.astype(bf16).reshape(b_blk, seq_len, n_head * d_k)
        Kb = K.astype(bf16).reshape(b_blk, seq_len, n_head * d_k)
        Vb = V.astype(bf16).reshape(b_blk, seq_len, n_head * d_v)

        # Per-head attention.  Each head uses one dot_general batched over the
        # b_blk batch rows.  NO stores / NO scratch inside the loop: per-head
        # attn matrices are collected in values and stored once below; the fc
        # projection is accumulated head-by-head with row-sliced W_fc so the
        # context slab never has to be assembled with lane-offset stores.
        attn_heads = []
        o_acc = None
        for h in range(n_head):
            qh = Qb[:, :, h * d_k:(h + 1) * d_k]
            kh = Kb[:, :, h * d_k:(h + 1) * d_k]
            vh = Vb[:, :, h * d_v:(h + 1) * d_v]

            s = jnp.einsum('bqd,bkd->bqk', qh, kh,
                           preferred_element_type=jnp.float32)  # (b_blk, L, L)
            s = s - jnp.max(s, axis=-1, keepdims=True)
            e = jnp.exp(s)
            denom = jnp.sum(e, axis=-1, keepdims=True)
            p = e * pl.reciprocal(denom, approx=True)           # softmax, f32
            attn_heads.append(p)

            # Head context (b_blk, L, d_v), f32 accumulation.
            ctx_h = jnp.einsum('bqk,bkd->bqd', p.astype(bf16), vh,
                               preferred_element_type=jnp.float32)
            # fc contribution of this head: (m_rows, d_v) @ (d_v, D).
            # Row-slicing wfc_ref is a cheap static sublane-dim slice.
            part = jnp.dot(ctx_h.reshape(m_rows, d_v).astype(bf16),
                           wfc_ref[h * d_v:(h + 1) * d_v, :],
                           preferred_element_type=jnp.float32)
            o_acc = part if o_acc is None else o_acc + part

        # Residual add + LayerNorm(eps=1e-12), once for the (B_blk*L, D) slab.
        o = o_acc + bfc_ref[...] + xq
        mu = jnp.mean(o, axis=-1, keepdims=True)
        var = jnp.mean((o - mu) ** 2, axis=-1, keepdims=True)
        o = (o - mu) * jax.lax.rsqrt(var + eps)
        o = o * gamma_ref[...] + beta_ref[...]
        out_ref[...] = o.reshape(b_blk, seq_len, d_model)

        if return_attn:
            # Single store of the whole (B_blk, H, L, L) block (stack over the
            # leading head axis).  At production seq lengths (L a multiple of
            # 128) this store is lane-dense.
            attn_refs[0][...] = jnp.stack(attn_heads, axis=1)

    return kernel


# ------------------------------ heuristics --------------------------------
def _pick_b_blk(B, L, max_rows=512):
    """Largest batch-block whose flattened row count stays <= max_rows while
    keeping >= 2 grid steps when possible (so both v7x TensorCores get work)."""
    divs = [d for d in range(1, B + 1) if B % d == 0 and d * L <= max_rows]
    if not divs:
        return 1
    pref = [d for d in divs if B // d >= 2]
    return max(pref) if pref else max(divs)


def _vmem_limit_bytes(b_blk, L, D, n_head, d_k, d_v, return_attn):
    """Rough VMEM budget: double-buffered act/out/attn blocks + bf16 weights,
    with generous slack for intermediates; clamped to a portable range."""
    act_blk = b_blk * L * D * 4
    attn_blk = b_blk * n_head * L * L * 4 if return_attn else 0
    w_bytes = 2 * (2 * D * n_head * d_k * 2 +     # wq, wk (bf16, dbl-buffered)
                   D * n_head * d_v * 2 +         # wv
                   n_head * d_v * D * 2)          # fc
    est = 2 * (3 * act_blk + act_blk + attn_blk) + w_bytes
    est = est * 2 + (8 << 20)
    # NOTE: v7x has only 64 MiB physical VMEM per TC; at production sizes keep
    # b_blk (and, if needed, a head/kv grid axis) small enough to fit.
    return int(min(max(est, 32 << 20), 96 << 20))


# ------------------------------- wrapper ----------------------------------
def prepare_params(params):
    """Cast projection weights to bf16 once, outside the per-call path."""
    wq, bq, wk, bk, wv, bv, wfc, bfc, gamma, beta = params
    cast = lambda w: w.astype(jnp.bfloat16)
    return (cast(wq), bq, cast(wk), bk, cast(wv), bv, cast(wfc), bfc,
            gamma, beta)


def tensor_attention(q, k, v, params, *, n_head, d_k, d_v,
                     b_blk=None, return_attn=True):
    """Forward of Tensor_Attention.  Returns (out, attn) (attn=None if skipped)."""
    B, L, D = q.shape
    wq, bq, wk, bk, wv, bv, wfc, bfc, gamma, beta = params

    if b_blk is None:
        b_blk = _pick_b_blk(B, L)
    assert B % b_blk == 0
    grid = (B // b_blk,)

    # Weights feed the MXU in bf16; prefer passing them pre-cast (prepare_params)
    # so this astype is a no-op and no per-call HBM re-read is issued.
    as_bf16 = lambda w: w if w.dtype == jnp.bfloat16 else w.astype(jnp.bfloat16)
    wq_b, wk_b, wv_b, wfc_b = map(as_bf16, (wq, wk, wv, wfc))

    temperature = d_k ** 0.5
    kernel = _make_kernel(b_blk, L, D, n_head, d_k, d_v, temperature, 1e-12,
                          return_attn)

    def full2(shape):
        # Constant-index weight/bias blocks (resident for the whole grid).
        return pl.BlockSpec(shape, lambda b: (0, 0))

    act_spec = pl.BlockSpec((b_blk, L, D), lambda b: (b, 0, 0))
    in_specs = [
        act_spec, act_spec, act_spec,
        full2((D, n_head * d_k)), full2((1, n_head * d_k)),   # w_qs
        full2((D, n_head * d_k)), full2((1, n_head * d_k)),   # w_ks
        full2((D, n_head * d_v)), full2((1, n_head * d_v)),   # w_vs
        full2((n_head * d_v, D)), full2((1, D)),               # fc
        full2((1, D)), full2((1, D)),                          # layer_norm
    ]
    out_spec_o = pl.BlockSpec((b_blk, L, D), lambda b: (b, 0, 0))
    if return_attn:
        out_shape = (jax.ShapeDtypeStruct((B, L, D), jnp.float32),
                     jax.ShapeDtypeStruct((B, n_head, L, L), jnp.float32))
        out_specs = (out_spec_o,
                     pl.BlockSpec((b_blk, n_head, L, L),
                                  lambda b: (b, 0, 0, 0)))
    else:
        out_shape = jax.ShapeDtypeStruct((B, L, D), jnp.float32)
        out_specs = out_spec_o

    f = pl.pallas_call(
        kernel,
        grid=grid,
        in_specs=in_specs,
        out_specs=out_specs,
        out_shape=out_shape,
        compiler_params=pltpu.CompilerParams(
            dimension_semantics=("parallel",),
            vmem_limit_bytes=_vmem_limit_bytes(b_blk, L, D, n_head, d_k, d_v,
                                               return_attn)),
    )
    res = f(q, k, v, wq_b, bq, wk_b, bk, wv_b, bv, wfc_b, bfc, gamma, beta)
    if return_attn:
        return res
    return res, None


# --------------------------- pure-JAX reference ---------------------------
def reference(q, k, v, params, *, n_head, d_k, d_v):
    wq, bq, wk, bk, wv, bv, wfc, bfc, gamma, beta = params
    B, L, D = q.shape
    Q = (q @ wq + bq).reshape(B, L, n_head, d_k).transpose(0, 2, 1, 3)
    K = (k @ wk + bk).reshape(B, L, n_head, d_k).transpose(0, 2, 1, 3)
    V = (v @ wv + bv).reshape(B, L, n_head, d_v).transpose(0, 2, 1, 3)
    scores = jnp.einsum('bhqd,bhkd->bhqk', Q / (d_k ** 0.5), K)
    attn = jax.nn.softmax(scores, axis=-1)
    o = jnp.einsum('bhqk,bhkd->bhqd', attn, V).transpose(0, 2, 1, 3).reshape(B, L, -1)
    o = o @ wfc + bfc + q
    mu = o.mean(-1, keepdims=True)
    var = ((o - mu) ** 2).mean(-1, keepdims=True)
    o = (o - mu) / jnp.sqrt(var + 1e-12) * gamma + beta
    return o, attn


# --------------------------------- main ------------------------------------
if __name__ == "__main__":
    # Small shapes consistent with the module's forward:
    B, L = 2, 8
    d_model = 32
    n_head, d_q, d_k, d_v = 4, 8, 8, 8

    key = jax.random.PRNGKey(0)
    keys = jax.random.split(key, 16)
    sc = 0.1

    q_in = jax.random.normal(keys[0], (B, L, d_model), jnp.float32)
    k_in = jax.random.normal(keys[1], (B, L, d_model), jnp.float32)
    v_in = jax.random.normal(keys[2], (B, L, d_model), jnp.float32)

    wq = sc * jax.random.normal(keys[3], (d_model, n_head * d_q), jnp.float32)
    bq = sc * jax.random.normal(keys[4], (1, n_head * d_q), jnp.float32)
    wk = sc * jax.random.normal(keys[5], (d_model, n_head * d_k), jnp.float32)
    bk = sc * jax.random.normal(keys[6], (1, n_head * d_k), jnp.float32)
    wv = sc * jax.random.normal(keys[7], (d_model, n_head * d_v), jnp.float32)
    bv = sc * jax.random.normal(keys[8], (1, n_head * d_v), jnp.float32)
    wfc = sc * jax.random.normal(keys[9], (n_head * d_v, d_model), jnp.float32)
    bfc = sc * jax.random.normal(keys[10], (1, d_model), jnp.float32)
    gamma = jnp.ones((1, d_model), jnp.float32)
    beta = jnp.zeros((1, d_model), jnp.float32)

    params_f32 = (wq, bq, wk, bk, wv, bv, wfc, bfc, gamma, beta)
    # Cast projection weights to bf16 ONCE (outside the per-forward path).
    params_dev = prepare_params(params_f32)

    # Full forward (returns attn for module parity).
    out, attn = tensor_attention(q_in, k_in, v_in, params_dev,
                                 n_head=n_head, d_k=d_k, d_v=d_v)
    out, attn = jax.block_until_ready((out, attn))

    # Fast path: skip the (B, H, L, L) attention writeback entirely.
    out2, _ = tensor_attention(q_in, k_in, v_in, params_dev,
                               n_head=n_head, d_k=d_k, d_v=d_v,
                               return_attn=False)
    out2 = jax.block_until_ready(out2)

    out_ref, attn_ref = reference(q_in, k_in, v_in, params_f32,
                                  n_head=n_head, d_k=d_k, d_v=d_v)
    # bf16 MXU inputs + approx reciprocal -> compare vs. the f32 reference with
    # a slightly loosened tolerance.
    assert jnp.allclose(out, out_ref, rtol=2e-2, atol=2e-2)
    assert jnp.allclose(out2, out_ref, rtol=2e-2, atol=2e-2)
    assert jnp.allclose(attn, attn_ref, rtol=2e-2, atol=2e-2)

    print("KERNEL_OK")
</pallas_src>

<mosaic_0001>
module attributes {stable_mosaic.version = 11 : i64} {
  func.func @kernel(%arg0: i32, %arg1: memref<1x8x32xf32, #tpu.memory_space<vmem>>, %arg2: memref<1x8x32xf32, #tpu.memory_space<vmem>>, %arg3: memref<1x8x32xf32, #tpu.memory_space<vmem>>, %arg4: memref<32x32xbf16, #tpu.memory_space<vmem>>, %arg5: memref<1x32xf32, #tpu.memory_space<vmem>>, %arg6: memref<32x32xbf16, #tpu.memory_space<vmem>>, %arg7: memref<1x32xf32, #tpu.memory_space<vmem>>, %arg8: memref<32x32xbf16, #tpu.memory_space<vmem>>, %arg9: memref<1x32xf32, #tpu.memory_space<vmem>>, %arg10: memref<32x32xbf16, #tpu.memory_space<vmem>>, %arg11: memref<1x32xf32, #tpu.memory_space<vmem>>, %arg12: memref<1x32xf32, #tpu.memory_space<vmem>>, %arg13: memref<1x32xf32, #tpu.memory_space<vmem>>, %arg14: memref<1x8x32xf32, #tpu.memory_space<vmem>>, %arg15: memref<1x4x8x8xf32, #tpu.memory_space<vmem>>) attributes {dimension_semantics = [#tpu.dimension_semantics<parallel>], iteration_bounds = array<i64: 2>, scalar_prefetch = 0 : i64, scratch_operands = 0 : i64, tpu.core_type = #tpu.core_type<tc>, window_params = [{transform_indices = @transform_0, window_bounds = array<i64: 1, 8, 32>}, {transform_indices = @transform_1, window_bounds = array<i64: 1, 8, 32>}, {transform_indices = @transform_2, window_bounds = array<i64: 1, 8, 32>}, {pipeline_mode = #tpu.pipeline_mode<synchronous>, transform_indices = @transform_3, window_bounds = array<i64: 32, 32>}, {pipeline_mode = #tpu.pipeline_mode<synchronous>, transform_indices = @transform_4, window_bounds = array<i64: 1, 32>}, {pipeline_mode = #tpu.pipeline_mode<synchronous>, transform_indices = @transform_5, window_bounds = array<i64: 32, 32>}, {pipeline_mode = #tpu.pipeline_mode<synchronous>, transform_indices = @transform_6, window_bounds = array<i64: 1, 32>}, {pipeline_mode = #tpu.pipeline_mode<synchronous>, transform_indices = @transform_7, window_bounds = array<i64: 32, 32>}, {pipeline_mode = #tpu.pipeline_mode<synchronous>, transform_indices = @transform_8, window_bounds = array<i64: 1, 32>}, {pipeline_mode = #tpu.pipeline_mode<synchronous>, transform_indices = @transform_9, window_bounds = array<i64: 32, 32>}, {pipeline_mode = #tpu.pipeline_mode<synchronous>, transform_indices = @transform_10, window_bounds = array<i64: 1, 32>}, {pipeline_mode = #tpu.pipeline_mode<synchronous>, transform_indices = @transform_11, window_bounds = array<i64: 1, 32>}, {pipeline_mode = #tpu.pipeline_mode<synchronous>, transform_indices = @transform_12, window_bounds = array<i64: 1, 32>}, {transform_indices = @transform_13, window_bounds = array<i64: 1, 8, 32>}, {transform_indices = @transform_14, window_bounds = array<i64: 1, 4, 8, 8>}]} {
    %c0 = arith.constant 0 : index
    %c0_0 = arith.constant 0 : index
    %c0_1 = arith.constant 0 : index
    %0 = vector.load %arg1[%c0, %c0_0, %c0_1] : memref<1x8x32xf32, #tpu.memory_space<vmem>>, vector<1x8x32xf32>
    %1 = vector.shape_cast %0 : vector<1x8x32xf32> to vector<8x32xf32>
    %c0_2 = arith.constant 0 : index
    %c0_3 = arith.constant 0 : index
    %c0_4 = arith.constant 0 : index
    %2 = vector.load %arg2[%c0_2, %c0_3, %c0_4] : memref<1x8x32xf32, #tpu.memory_space<vmem>>, vector<1x8x32xf32>
    %3 = vector.shape_cast %2 : vector<1x8x32xf32> to vector<8x32xf32>
    %c0_5 = arith.constant 0 : index
    %c0_6 = arith.constant 0 : index
    %c0_7 = arith.constant 0 : index
    %4 = vector.load %arg3[%c0_5, %c0_6, %c0_7] : memref<1x8x32xf32, #tpu.memory_space<vmem>>, vector<1x8x32xf32>
    %5 = vector.shape_cast %4 : vector<1x8x32xf32> to vector<8x32xf32>
    %6 = arith.truncf %1 : vector<8x32xf32> to vector<8x32xbf16>
    %c0_8 = arith.constant 0 : index
    %c0_9 = arith.constant 0 : index
    %7 = vector.load %arg4[%c0_8, %c0_9] : memref<32x32xbf16, #tpu.memory_space<vmem>>, vector<32x32xbf16>
    %cst = arith.constant dense<0.000000e+00> : vector<8x32xf32>
    %8 = tpu.matmul %6, %7, %cst {dimension_numbers = #tpu.dot_dimension_numbers<[1], [0], [0], [1], [0, 0, 1, 1], [], []>} : vector<8x32xbf16>, vector<32x32xbf16>, vector<8x32xf32> -> vector<8x32xf32>
    %c0_10 = arith.constant 0 : index
    %c0_11 = arith.constant 0 : index
    %9 = vector.load %arg5[%c0_10, %c0_11] : memref<1x32xf32, #tpu.memory_space<vmem>>, vector<1x32xf32>
    %10 = vector.broadcast %9 : vector<1x32xf32> to vector<8x32xf32>
    %11 = arith.addf %8, %10 : vector<8x32xf32>
    %12 = arith.truncf %3 : vector<8x32xf32> to vector<8x32xbf16>
    %c0_12 = arith.constant 0 : index
    %c0_13 = arith.constant 0 : index
    %13 = vector.load %arg6[%c0_12, %c0_13] : memref<32x32xbf16, #tpu.memory_space<vmem>>, vector<32x32xbf16>
    %cst_14 = arith.constant dense<0.000000e+00> : vector<8x32xf32>
    %14 = tpu.matmul %12, %13, %cst_14 {dimension_numbers = #tpu.dot_dimension_numbers<[1], [0], [0], [1], [0, 0, 1, 1], [], []>} : vector<8x32xbf16>, vector<32x32xbf16>, vector<8x32xf32> -> vector<8x32xf32>
    %c0_15 = arith.constant 0 : index
    %c0_16 = arith.constant 0 : index
    %15 = vector.load %arg7[%c0_15, %c0_16] : memref<1x32xf32, #tpu.memory_space<vmem>>, vector<1x32xf32>
    %16 = vector.broadcast %15 : vector<1x32xf32> to vector<8x32xf32>
    %17 = arith.addf %14, %16 : vector<8x32xf32>
    %18 = arith.truncf %5 : vector<8x32xf32> to vector<8x32xbf16>
    %c0_17 = arith.constant 0 : index
    %c0_18 = arith.constant 0 : index
    %19 = vector.load %arg8[%c0_17, %c0_18] : memref<32x32xbf16, #tpu.memory_space<vmem>>, vector<32x32xbf16>
    %cst_19 = arith.constant dense<0.000000e+00> : vector<8x32xf32>
    %20 = tpu.matmul %18, %19, %cst_19 {dimension_numbers = #tpu.dot_dimension_numbers<[1], [0], [0], [1], [0, 0, 1, 1], [], []>} : vector<8x32xbf16>, vector<32x32xbf16>, vector<8x32xf32> -> vector<8x32xf32>
    %c0_20 = arith.constant 0 : index
    %c0_21 = arith.constant 0 : index
    %21 = vector.load %arg9[%c0_20, %c0_21] : memref<1x32xf32, #tpu.memory_space<vmem>>, vector<1x32xf32>
    %22 = vector.broadcast %21 : vector<1x32xf32> to vector<8x32xf32>
    %23 = arith.addf %20, %22 : vector<8x32xf32>
    %cst_22 = arith.constant 0.353553385 : f32
    %24 = vector.broadcast %cst_22 : f32 to vector<8x32xf32>
    %25 = arith.mulf %11, %24 : vector<8x32xf32>
    %26 = arith.truncf %25 : vector<8x32xf32> to vector<8x32xbf16>
    %27 = vector.shape_cast %26 : vector<8x32xbf16> to vector<1x8x32xbf16>
    %28 = arith.truncf %17 : vector<8x32xf32> to vector<8x32xbf16>
    %29 = vector.shape_cast %28 : vector<8x32xbf16> to vector<1x8x32xbf16>
    %30 = arith.truncf %23 : vector<8x32xf32> to vector<8x32xbf16>
    %31 = vector.shape_cast %30 : vector<8x32xbf16> to vector<1x8x32xbf16>
    %32 = vector.extract_strided_slice %27 {offsets = [0, 0, 0], sizes = [1, 8, 8], strides = [1, 1, 1]} : vector<1x8x32xbf16> to vector<1x8x8xbf16>
    %33 = vector.extract_strided_slice %29 {offsets = [0, 0, 0], sizes = [1, 8, 8], strides = [1, 1, 1]} : vector<1x8x32xbf16> to vector<1x8x8xbf16>
    %34 = vector.extract_strided_slice %31 {offsets = [0, 0, 0], sizes = [1, 8, 8], strides = [1, 1, 1]} : vector<1x8x32xbf16> to vector<1x8x8xbf16>
    "tpu.trace_start"() <{level = 10 : i32, message = "bqd,bkd->bqk"}> : () -> ()
    %cst_23 = arith.constant dense<0.000000e+00> : vector<1x8x8xf32>
    %35 = tpu.matmul %32, %33, %cst_23 {dimension_numbers = #tpu.dot_dimension_numbers<[2], [2], [1], [1], [0, 0, 0, 1, 1, 1], [0], [0]>} : vector<1x8x8xbf16>, vector<1x8x8xbf16>, vector<1x8x8xf32> -> vector<1x8x8xf32>
    "tpu.trace_stop"() : () -> ()
    %cst_24 = arith.constant dense<0xFF800000> : vector<1x8xf32>
    %36 = vector.multi_reduction <maximumf>, %35, %cst_24 [2] : vector<1x8x8xf32> to vector<1x8xf32>
    %37 = vector.shape_cast %36 : vector<1x8xf32> to vector<1x8x1xf32>
    %38 = vector.broadcast %37 : vector<1x8x1xf32> to vector<1x8x8xf32>
    %39 = arith.subf %35, %38 : vector<1x8x8xf32>
    %40 = math.exp %39 : vector<1x8x8xf32>
    %cst_25 = arith.constant dense<0.000000e+00> : vector<1x8xf32>
    %41 = vector.multi_reduction <add>, %40, %cst_25 [2] : vector<1x8x8xf32> to vector<1x8xf32>
    %42 = vector.shape_cast %41 : vector<1x8xf32> to vector<1x8x1xf32>
    %43 = tpu.reciprocal %42 {approx = true} : vector<1x8x1xf32> -> vector<1x8x1xf32>
    %44 = vector.broadcast %43 : vector<1x8x1xf32> to vector<1x8x8xf32>
    %45 = arith.mulf %40, %44 : vector<1x8x8xf32>
    %46 = arith.truncf %45 : vector<1x8x8xf32> to vector<1x8x8xbf16>
    "tpu.trace_start"() <{level = 10 : i32, message = "bqk,bkd->bqd"}> : () -> ()
    %cst_26 = arith.constant dense<0.000000e+00> : vector<1x8x8xf32>
    %47 = tpu.matmul %46, %34, %cst_26 {dimension_numbers = #tpu.dot_dimension_numbers<[2], [1], [1], [2], [0, 0, 0, 1, 1, 2], [0], [0]>} : vector<1x8x8xbf16>, vector<1x8x8xbf16>, vector<1x8x8xf32> -> vector<1x8x8xf32>
    "tpu.trace_stop"() : () -> ()
    %48 = vector.shape_cast %47 : vector<1x8x8xf32> to vector<8x8xf32>
    %49 = arith.truncf %48 : vector<8x8xf32> to vector<8x8xbf16>
    %c0_27 = arith.constant 0 : index
    %c0_28 = arith.constant 0 : index
    %50 = vector.load %arg10[%c0_27, %c0_28] : memref<32x32xbf16, #tpu.memory_space<vmem>>, vector<8x32xbf16>
    %cst_29 = arith.constant dense<0.000000e+00> : vector<8x32xf32>
    %51 = tpu.matmul %49, %50, %cst_29 {dimension_numbers = #tpu.dot_dimension_numbers<[1], [0], [0], [1], [0, 0, 1, 1], [], []>} : vector<8x8xbf16>, vector<8x32xbf16>, vector<8x32xf32> -> vector<8x32xf32>
    %52 = vector.extract_strided_slice %27 {offsets = [0, 0, 8], sizes = [1, 8, 8], strides = [1, 1, 1]} : vector<1x8x32xbf16> to vector<1x8x8xbf16>
    %53 = vector.extract_strided_slice %29 {offsets = [0, 0, 8], sizes = [1, 8, 8], strides = [1, 1, 1]} : vector<1x8x32xbf16> to vector<1x8x8xbf16>
    %54 = vector.extract_strided_slice %31 {offsets = [0, 0, 8], sizes = [1, 8, 8], strides = [1, 1, 1]} : vector<1x8x32xbf16> to vector<1x8x8xbf16>
    "tpu.trace_start"() <{level = 10 : i32, message = "bqd,bkd->bqk"}> : () -> ()
    %cst_30 = arith.constant dense<0.000000e+00> : vector<1x8x8xf32>
    %55 = tpu.matmul %52, %53, %cst_30 {dimension_numbers = #tpu.dot_dimension_numbers<[2], [2], [1], [1], [0, 0, 0, 1, 1, 1], [0], [0]>} : vector<1x8x8xbf16>, vector<1x8x8xbf16>, vector<1x8x8xf32> -> vector<1x8x8xf32>
    "tpu.trace_stop"() : () -> ()
    %cst_31 = arith.constant dense<0xFF800000> : vector<1x8xf32>
    %56 = vector.multi_reduction <maximumf>, %55, %cst_31 [2] : vector<1x8x8xf32> to vector<1x8xf32>
    %57 = vector.shape_cast %56 : vector<1x8xf32> to vector<1x8x1xf32>
    %58 = vector.broadcast %57 : vector<1x8x1xf32> to vector<1x8x8xf32>
    %59 = arith.subf %55, %58 : vector<1x8x8xf32>
    %60 = math.exp %59 : vector<1x8x8xf32>
    %cst_32 = arith.constant dense<0.000000e+00> : vector<1x8xf32>
    %61 = vector.multi_reduction <add>, %60, %cst_32 [2] : vector<1x8x8xf32> to vector<1x8xf32>
    %62 = vector.shape_cast %61 : vector<1x8xf32> to vector<1x8x1xf32>
    %63 = tpu.reciprocal %62 {approx = true} : vector<1x8x1xf32> -> vector<1x8x1xf32>
    %64 = vector.broadcast %63 : vector<1x8x1xf32> to vector<1x8x8xf32>
    %65 = arith.mulf %60, %64 : vector<1x8x8xf32>
    %66 = arith.truncf %65 : vector<1x8x8xf32> to vector<1x8x8xbf16>
    "tpu.trace_start"() <{level = 10 : i32, message = "bqk,bkd->bqd"}> : () -> ()
    %cst_33 = arith.constant dense<0.000000e+00> : vector<1x8x8xf32>
    %67 = tpu.matmul %66, %54, %cst_33 {dimension_numbers = #tpu.dot_dimension_numbers<[2], [1], [1], [2], [0, 0, 0, 1, 1, 2], [0], [0]>} : vector<1x8x8xbf16>, vector<1x8x8xbf16>, vector<1x8x8xf32> -> vector<1x8x8xf32>
    "tpu.trace_stop"() : () -> ()
    %68 = vector.shape_cast %67 : vector<1x8x8xf32> to vector<8x8xf32>
    %69 = arith.truncf %68 : vector<8x8xf32> to vector<8x8xbf16>
    %c8 = arith.constant 8 : index
    %c0_34 = arith.constant 0 : index
    %70 = vector.load %arg10[%c8, %c0_34] : memref<32x32xbf16, #tpu.memory_space<vmem>>, vector<8x32xbf16>
    %cst_35 = arith.constant dense<0.000000e+00> : vector<8x32xf32>
    %71 = tpu.matmul %69, %70, %cst_35 {dimension_numbers = #tpu.dot_dimension_numbers<[1], [0], [0], [1], [0, 0, 1, 1], [], []>} : vector<8x8xbf16>, vector<8x32xbf16>, vector<8x32xf32> -> vector<8x32xf32>
    %72 = arith.addf %51, %71 : vector<8x32xf32>
    %73 = vector.extract_strided_slice %27 {offsets = [0, 0, 16], sizes = [1, 8, 8], strides = [1, 1, 1]} : vector<1x8x32xbf16> to vector<1x8x8xbf16>
    %74 = vector.extract_strided_slice %29 {offsets = [0, 0, 16], sizes = [1, 8, 8], strides = [1, 1, 1]} : vector<1x8x32xbf16> to vector<1x8x8xbf16>
    %75 = vector.extract_strided_slice %31 {offsets = [0, 0, 16], sizes = [1, 8, 8], strides = [1, 1, 1]} : vector<1x8x32xbf16> to vector<1x8x8xbf16>
    "tpu.trace_start"() <{level = 10 : i32, message = "bqd,bkd->bqk"}> : () -> ()
    %cst_36 = arith.constant dense<0.000000e+00> : vector<1x8x8xf32>
    %76 = tpu.matmul %73, %74, %cst_36 {dimension_numbers = #tpu.dot_dimension_numbers<[2], [2], [1], [1], [0, 0, 0, 1, 1, 1], [0], [0]>} : vector<1x8x8xbf16>, vector<1x8x8xbf16>, vector<1x8x8xf32> -> vector<1x8x8xf32>
    "tpu.trace_stop"() : () -> ()
    %cst_37 = arith.constant dense<0xFF800000> : vector<1x8xf32>
    %77 = vector.multi_reduction <maximumf>, %76, %cst_37 [2] : vector<1x8x8xf32> to vector<1x8xf32>
    %78 = vector.shape_cast %77 : vector<1x8xf32> to vector<1x8x1xf32>
    %79 = vector.broadcast %78 : vector<1x8x1xf32> to vector<1x8x8xf32>
    %80 = arith.subf %76, %79 : vector<1x8x8xf32>
    %81 = math.exp %80 : vector<1x8x8xf32>
    %cst_38 = arith.constant dense<0.000000e+00> : vector<1x8xf32>
    %82 = vector.multi_reduction <add>, %81, %cst_38 [2] : vector<1x8x8xf32> to vector<1x8xf32>
    %83 = vector.shape_cast %82 : vector<1x8xf32> to vector<1x8x1xf32>
    %84 = tpu.reciprocal %83 {approx = true} : vector<1x8x1xf32> -> vector<1x8x1xf32>
    %85 = vector.broadcast %84 : vector<1x8x1xf32> to vector<1x8x8xf32>
    %86 = arith.mulf %81, %85 : vector<1x8x8xf32>
    %87 = arith.truncf %86 : vector<1x8x8xf32> to vector<1x8x8xbf16>
    "tpu.trace_start"() <{level = 10 : i32, message = "bqk,bkd->bqd"}> : () -> ()
    %cst_39 = arith.constant dense<0.000000e+00> : vector<1x8x8xf32>
    %88 = tpu.matmul %87, %75, %cst_39 {dimension_numbers = #tpu.dot_dimension_numbers<[2], [1], [1], [2], [0, 0, 0, 1, 1, 2], [0], [0]>} : vector<1x8x8xbf16>, vector<1x8x8xbf16>, vector<1x8x8xf32> -> vector<1x8x8xf32>
    "tpu.trace_stop"() : () -> ()
    %89 = vector.shape_cast %88 : vector<1x8x8xf32> to vector<8x8xf32>
    %90 = arith.truncf %89 : vector<8x8xf32> to vector<8x8xbf16>
    %c16 = arith.constant 16 : index
    %c0_40 = arith.constant 0 : index
    %91 = vector.load %arg10[%c16, %c0_40] : memref<32x32xbf16, #tpu.memory_space<vmem>>, vector<8x32xbf16>
    %cst_41 = arith.constant dense<0.000000e+00> : vector<8x32xf32>
    %92 = tpu.matmul %90, %91, %cst_41 {dimension_numbers = #tpu.dot_dimension_numbers<[1], [0], [0], [1], [0, 0, 1, 1], [], []>} : vector<8x8xbf16>, vector<8x32xbf16>, vector<8x32xf32> -> vector<8x32xf32>
    %93 = arith.addf %72, %92 : vector<8x32xf32>
    %94 = vector.extract_strided_slice %27 {offsets = [0, 0, 24], sizes = [1, 8, 8], strides = [1, 1, 1]} : vector<1x8x32xbf16> to vector<1x8x8xbf16>
    %95 = vector.extract_strided_slice %29 {offsets = [0, 0, 24], sizes = [1, 8, 8], strides = [1, 1, 1]} : vector<1x8x32xbf16> to vector<1x8x8xbf16>
    %96 = vector.extract_strided_slice %31 {offsets = [0, 0, 24], sizes = [1, 8, 8], strides = [1, 1, 1]} : vector<1x8x32xbf16> to vector<1x8x8xbf16>
    "tpu.trace_start"() <{level = 10 : i32, message = "bqd,bkd->bqk"}> : () -> ()
    %cst_42 = arith.constant dense<0.000000e+00> : vector<1x8x8xf32>
    %97 = tpu.matmul %94, %95, %cst_42 {dimension_numbers = #tpu.dot_dimension_numbers<[2], [2], [1], [1], [0, 0, 0, 1, 1, 1], [0], [0]>} : vector<1x8x8xbf16>, vector<1x8x8xbf16>, vector<1x8x8xf32> -> vector<1x8x8xf32>
    "tpu.trace_stop"() : () -> ()
    %cst_43 = arith.constant dense<0xFF800000> : vector<1x8xf32>
    %98 = vector.multi_reduction <maximumf>, %97, %cst_43 [2] : vector<1x8x8xf32> to vector<1x8xf32>
    %99 = vector.shape_cast %98 : vector<1x8xf32> to vector<1x8x1xf32>
    %100 = vector.broadcast %99 : vector<1x8x1xf32> to vector<1x8x8xf32>
    %101 = arith.subf %97, %100 : vector<1x8x8xf32>
    %102 = math.exp %101 : vector<1x8x8xf32>
    %cst_44 = arith.constant dense<0.000000e+00> : vector<1x8xf32>
    %103 = vector.multi_reduction <add>, %102, %cst_44 [2] : vector<1x8x8xf32> to vector<1x8xf32>
    %104 = vector.shape_cast %103 : vector<1x8xf32> to vector<1x8x1xf32>
    %105 = tpu.reciprocal %104 {approx = true} : vector<1x8x1xf32> -> vector<1x8x1xf32>
    %106 = vector.broadcast %105 : vector<1x8x1xf32> to vector<1x8x8xf32>
    %107 = arith.mulf %102, %106 : vector<1x8x8xf32>
    %108 = arith.truncf %107 : vector<1x8x8xf32> to vector<1x8x8xbf16>
    "tpu.trace_start"() <{level = 10 : i32, message = "bqk,bkd->bqd"}> : () -> ()
    %cst_45 = arith.constant dense<0.000000e+00> : vector<1x8x8xf32>
    %109 = tpu.matmul %108, %96, %cst_45 {dimension_numbers = #tpu.dot_dimension_numbers<[2], [1], [1], [2], [0, 0, 0, 1, 1, 2], [0], [0]>} : vector<1x8x8xbf16>, vector<1x8x8xbf16>, vector<1x8x8xf32> -> vector<1x8x8xf32>
    "tpu.trace_stop"() : () -> ()
    %110 = vector.shape_cast %109 : vector<1x8x8xf32> to vector<8x8xf32>
    %111 = arith.truncf %110 : vector<8x8xf32> to vector<8x8xbf16>
    %c24 = arith.constant 24 : index
    %c0_46 = arith.constant 0 : index
    %112 = vector.load %arg10[%c24, %c0_46] : memref<32x32xbf16, #tpu.memory_space<vmem>>, vector<8x32xbf16>
    %cst_47 = arith.constant dense<0.000000e+00> : vector<8x32xf32>
    %113 = tpu.matmul %111, %112, %cst_47 {dimension_numbers = #tpu.dot_dimension_numbers<[1], [0], [0], [1], [0, 0, 1, 1], [], []>} : vector<8x8xbf16>, vector<8x32xbf16>, vector<8x32xf32> -> vector<8x32xf32>
    %114 = arith.addf %93, %113 : vector<8x32xf32>
    %c0_48 = arith.constant 0 : index
    %c0_49 = arith.constant 0 : index
    %115 = vector.load %arg11[%c0_48, %c0_49] : memref<1x32xf32, #tpu.memory_space<vmem>>, vector<1x32xf32>
    %116 = vector.broadcast %115 : vector<1x32xf32> to vector<8x32xf32>
    %117 = arith.addf %114, %116 : vector<8x32xf32>
    %118 = arith.addf %117, %1 : vector<8x32xf32>
    %cst_50 = arith.constant dense<0.000000e+00> : vector<8xf32>
    %119 = vector.multi_reduction <add>, %118, %cst_50 [1] : vector<8x32xf32> to vector<8xf32>
    %120 = vector.shape_cast %119 : vector<8xf32> to vector<8x1xf32>
    %cst_51 = arith.constant 3.200000e+01 : f32
    %121 = vector.broadcast %cst_51 : f32 to vector<8x1xf32>
    %122 = arith.divf %120, %121 : vector<8x1xf32>
    %123 = vector.broadcast %122 : vector<8x1xf32> to vector<8x32xf32>
    %124 = arith.subf %118, %123 : vector<8x32xf32>
    %125 = arith.mulf %124, %124 : vector<8x32xf32>
    %cst_52 = arith.constant dense<0.000000e+00> : vector<8xf32>
    %126 = vector.multi_reduction <add>, %125, %cst_52 [1] : vector<8x32xf32> to vector<8xf32>
    %127 = vector.shape_cast %126 : vector<8xf32> to vector<8x1xf32>
    %cst_53 = arith.constant 3.200000e+01 : f32
    %128 = vector.broadcast %cst_53 : f32 to vector<8x1xf32>
    %129 = arith.divf %127, %128 : vector<8x1xf32>
    %130 = vector.broadcast %122 : vector<8x1xf32> to vector<8x32xf32>
    %131 = arith.subf %118, %130 : vector<8x32xf32>
    %cst_54 = arith.constant 9.99999996E-13 : f32
    %132 = vector.broadcast %cst_54 : f32 to vector<8x1xf32>
    %133 = arith.addf %129, %132 : vector<8x1xf32>
    %134 = math.rsqrt %133 : vector<8x1xf32>
    %135 = vector.broadcast %134 : vector<8x1xf32> to vector<8x32xf32>
    %136 = arith.mulf %131, %135 : vector<8x32xf32>
    %c0_55 = arith.constant 0 : index
    %c0_56 = arith.constant 0 : index
    %137 = vector.load %arg12[%c0_55, %c0_56] : memref<1x32xf32, #tpu.memory_space<vmem>>, vector<1x32xf32>
    %138 = vector.broadcast %137 : vector<1x32xf32> to vector<8x32xf32>
    %139 = arith.mulf %136, %138 : vector<8x32xf32>
    %c0_57 = arith.constant 0 : index
    %c0_58 = arith.constant 0 : index
    %140 = vector.load %arg13[%c0_57, %c0_58] : memref<1x32xf32, #tpu.memory_space<vmem>>, vector<1x32xf32>
    %141 = vector.broadcast %140 : vector<1x32xf32> to vector<8x32xf32>
    %142 = arith.addf %139, %141 : vector<8x32xf32>
    %143 = vector.shape_cast %142 : vector<8x32xf32> to vector<1x8x32xf32>
    %c0_59 = arith.constant 0 : index
    %c0_60 = arith.constant 0 : index
    %c0_61 = arith.constant 0 : index
    %144 = vector.load %arg14[%c0_59, %c0_60, %c0_61] : memref<1x8x32xf32, #tpu.memory_space<vmem>>, vector<1x8x32xf32>
    tpu.vector_store %arg14[%c0_59, %c0_60, %c0_61], %143 {strides = array<i32>} : memref<1x8x32xf32, #tpu.memory_space<vmem>>, vector<1x8x32xf32>,
    %145 = vector.shape_cast %45 : vector<1x8x8xf32> to vector<1x1x8x8xf32>
    %146 = vector.shape_cast %65 : vector<1x8x8xf32> to vector<1x1x8x8xf32>
    %147 = vector.shape_cast %86 : vector<1x8x8xf32> to vector<1x1x8x8xf32>
    %148 = vector.shape_cast %107 : vector<1x8x8xf32> to vector<1x1x8x8xf32>
    %149 = tpu.concatenate %145, %146, %147, %148 in 1 : vector<1x1x8x8xf32>, vector<1x1x8x8xf32>, vector<1x1x8x8xf32>, vector<1x1x8x8xf32> -> vector<1x4x8x8xf32>
    %c0_62 = arith.constant 0 : index
    %c0_63 = arith.constant 0 : index
    %c0_64 = arith.constant 0 : index
    %c0_65 = arith.constant 0 : index
    %150 = vector.load %arg15[%c0_62, %c0_63, %c0_64, %c0_65] : memref<1x4x8x8xf32, #tpu.memory_space<vmem>>, vector<1x4x8x8xf32>
    tpu.vector_store %arg15[%c0_62, %c0_63, %c0_64, %c0_65], %149 {strides = array<i32>} : memref<1x4x8x8xf32, #tpu.memory_space<vmem>>, vector<1x4x8x8xf32>,
    return
  }
  func.func @transform_0(%arg0: i32) -> (i32, i32, i32) {
    %c0_i32 = arith.constant 0 : i32
    %c0_i32_0 = arith.constant 0 : i32
    %c0_i32_1 = arith.constant 0 : i32
    return %arg0, %c0_i32, %c0_i32_0 : i32, i32, i32
  }
  func.func @transform_1(%arg0: i32) -> (i32, i32, i32) {
    %c0_i32 = arith.constant 0 : i32
    %c0_i32_0 = arith.constant 0 : i32
    %c0_i32_1 = arith.constant 0 : i32
    return %arg0, %c0_i32, %c0_i32_0 : i32, i32, i32
  }
  func.func @transform_2(%arg0: i32) -> (i32, i32, i32) {
    %c0_i32 = arith.constant 0 : i32
    %c0_i32_0 = arith.constant 0 : i32
    %c0_i32_1 = arith.constant 0 : i32
    return %arg0, %c0_i32, %c0_i32_0 : i32, i32, i32
  }
  func.func @transform_3(%arg0: i32) -> (i32, i32) {
    %c0_i32 = arith.constant 0 : i32
    %c0_i32_0 = arith.constant 0 : i32
    %c0_i32_1 = arith.constant 0 : i32
    return %c0_i32, %c0_i32_0 : i32, i32
  }
  func.func @transform_4(%arg0: i32) -> (i32, i32) {
    %c0_i32 = arith.constant 0 : i32
    %c0_i32_0 = arith.constant 0 : i32
    %c0_i32_1 = arith.constant 0 : i32
    return %c0_i32, %c0_i32_0 : i32, i32
  }
  func.func @transform_5(%arg0: i32) -> (i32, i32) {
    %c0_i32 = arith.constant 0 : i32
    %c0_i32_0 = arith.constant 0 : i32
    %c0_i32_1 = arith.constant 0 : i32
    return %c0_i32, %c0_i32_0 : i32, i32
  }
  func.func @transform_6(%arg0: i32) -> (i32, i32) {
    %c0_i32 = arith.constant 0 : i32
    %c0_i32_0 = arith.constant 0 : i32
    %c0_i32_1 = arith.constant 0 : i32
    return %c0_i32, %c0_i32_0 : i32, i32
  }
  func.func @transform_7(%arg0: i32) -> (i32, i32) {
    %c0_i32 = arith.constant 0 : i32
    %c0_i32_0 = arith.constant 0 : i32
    %c0_i32_1 = arith.constant 0 : i32
    return %c0_i32, %c0_i32_0 : i32, i32
  }
  func.func @transform_8(%arg0: i32) -> (i32, i32) {
    %c0_i32 = arith.constant 0 : i32
    %c0_i32_0 = arith.constant 0 : i32
    %c0_i32_1 = arith.constant 0 : i32
    return %c0_i32, %c0_i32_0 : i32, i32
  }
  func.func @transform_9(%arg0: i32) -> (i32, i32) {
    %c0_i32 = arith.constant 0 : i32
    %c0_i32_0 = arith.constant 0 : i32
    %c0_i32_1 = arith.constant 0 : i32
    return %c0_i32, %c0_i32_0 : i32, i32
  }
  func.func @transform_10(%arg0: i32) -> (i32, i32) {
    %c0_i32 = arith.constant 0 : i32
    %c0_i32_0 = arith.constant 0 : i32
    %c0_i32_1 = arith.constant 0 : i32
    return %c0_i32, %c0_i32_0 : i32, i32
  }
  func.func @transform_11(%arg0: i32) -> (i32, i32) {
    %c0_i32 = arith.constant 0 : i32
    %c0_i32_0 = arith.constant 0 : i32
    %c0_i32_1 = arith.constant 0 : i32
    return %c0_i32, %c0_i32_0 : i32, i32
  }
  func.func @transform_12(%arg0: i32) -> (i32, i32) {
    %c0_i32 = arith.constant 0 : i32
    %c0_i32_0 = arith.constant 0 : i32
    %c0_i32_1 = arith.constant 0 : i32
    return %c0_i32, %c0_i32_0 : i32, i32
  }
  func.func @transform_13(%arg0: i32) -> (i32, i32, i32) {
    %c0_i32 = arith.constant 0 : i32
    %c0_i32_0 = arith.constant 0 : i32
    %c0_i32_1 = arith.constant 0 : i32
    return %arg0, %c0_i32, %c0_i32_0 : i32, i32, i32
  }
  func.func @transform_14(%arg0: i32) -> (i32, i32, i32, i32) {
    %c0_i32 = arith.constant 0 : i32
    %c0_i32_0 = arith.constant 0 : i32
    %c0_i32_1 = arith.constant 0 : i32
    %c0_i32_2 = arith.constant 0 : i32
    return %arg0, %c0_i32, %c0_i32_0, %c0_i32_1 : i32, i32, i32, i32
  }
}

</mosaic_0001>

<llo_original>
// kernel: tpu_custom_call.1
$region0: #{tpu_custom_call.1}
  #allocation0 [shape = 'u32[]', space=smem, size = 0x4, offset = 0x4, fixed_abs, tag = 'smem constant byte address 0x4 - core index']
  #allocation1 [shape = 'u32[144,128]{1,0:T(1,128)}', space=vmem, size = 0x12000, scoped, tag = 'internal scratch']
  %s0 = inlined_call_operand.hbm [shape: f32[2,8,32], index: 0, kind: input, shape index: {}]
  %s1 = inlined_call_operand.hbm [shape: f32[2,8,32], index: 1, kind: input, shape index: {}]
  %s2 = inlined_call_operand.hbm [shape: f32[2,8,32], index: 2, kind: input, shape index: {}]
  %s3 = inlined_call_operand.hbm [shape: bf16[32,32], index: 3, kind: input, shape index: {}]
  %s4 = inlined_call_operand.hbm [shape: f32[1,32], index: 4, kind: input, shape index: {}]
  %s5 = inlined_call_operand.hbm [shape: bf16[32,32], index: 5, kind: input, shape index: {}]
  %s6 = inlined_call_operand.hbm [shape: f32[1,32], index: 6, kind: input, shape index: {}]
  %s7 = inlined_call_operand.hbm [shape: bf16[32,32], index: 7, kind: input, shape index: {}]
  %s8 = inlined_call_operand.hbm [shape: f32[1,32], index: 8, kind: input, shape index: {}]
  %s9 = inlined_call_operand.vmem [shape: bf16[32,32], index: 9, kind: input, shape index: {}]
  %s10 = inlined_call_operand.vmem [shape: f32[1,32], index: 10, kind: input, shape index: {}]
  %s11 = inlined_call_operand.vmem [shape: f32[1,32], index: 11, kind: input, shape index: {}]
  %s12 = inlined_call_operand.vmem [shape: f32[1,32], index: 12, kind: input, shape index: {}]
  %s13 = inlined_call_operand.hbm [shape: f32[2,8,32], index: 13, kind: output, shape index: {0}]
  %s14 = inlined_call_operand.hbm [shape: f32[2,4,8,8], index: 14, kind: output, shape index: {1}]
  %15 = xla_tuple %s13, %s14
  %s16 = sld [smem:[#allocation0]]
  $region129: #{tpu_custom_call.1} parent=0
    _
  %s18 = ssub.s32 1, %s16
  %s19 = scalar_select 0, %s18, %s16
  $region1: #{tpu_custom_call.1} parent=0
    #allocation2 [shape = 'u8[8192]{0}', space=vmem, size = 0x2000, scoped, tag = 'input window, operand 0']
    #allocation3 [shape = 's32[2]{0}', space=sflag, size = 0x8, scoped, tag = 'scoped memory for tpu_custom_call.1']
    #allocation4 [shape = 's32[2]{0}', space=sflag, size = 0x8, scoped, tag = 'scoped memory for tpu_custom_call.1']
    #allocation5 [shape = 'u8[8192]{0}', space=vmem, size = 0x2000, scoped, tag = 'input window, operand 1']
    #allocation6 [shape = 's32[2]{0}', space=sflag, size = 0x8, scoped, tag = 'scoped memory for tpu_custom_call.1']
    #allocation7 [shape = 'u8[8192]{0}', space=vmem, size = 0x2000, scoped, tag = 'input window, operand 2']
    #allocation8 [shape = 'u8[8192]{0}', space=vmem, size = 0x2000, scoped, tag = 'input window, operand 3, single buffered']
    #allocation9 [shape = 's32[1]{0}', space=sflag, size = 0x4, scoped, tag = 'scoped memory for tpu_custom_call.1']
    #allocation10 [shape = 'u8[512]{0}', space=vmem, size = 0x400, scoped, tag = 'input window, operand 4, single buffered']
    #allocation11 [shape = 'u8[8192]{0}', space=vmem, size = 0x2000, scoped, tag = 'input window, operand 5, single buffered']
    #allocation12 [shape = 's32[1]{0}', space=sflag, size = 0x4, scoped, tag = 'scoped memory for tpu_custom_call.1']
    #allocation13 [shape = 'u8[512]{0}', space=vmem, size = 0x400, scoped, tag = 'input window, operand 6, single buffered']
    #allocation14 [shape = 'u8[8192]{0}', space=vmem, size = 0x2000, scoped, tag = 'input window, operand 7, single buffered']
    #allocation15 [shape = 's32[1]{0}', space=sflag, size = 0x4, scoped, tag = 'scoped memory for tpu_custom_call.1']
    #allocation16 [shape = 'u8[512]{0}', space=vmem, size = 0x400, scoped, tag = 'input window, operand 8, single buffered']
    #allocation17 [shape = 'u8[8192]{0}', space=vmem, size = 0x2000, scoped, tag = 'output window, operand 0']
    #allocation18 [shape = 'u8[32768]{0}', space=vmem, size = 0x8000, scoped, tag = 'output window, operand 1']
    #allocation19 [shape = 's32[2]{0}', space=sflag, size = 0x8, scoped, tag = 'scoped memory for tpu_custom_call.1']
    %20 = vsyncpa [#allocation3], 0
    %s21 = scalar_lea.sflag [#allocation3], 1
    %22 = vsyncpa %s21, 0
    %23 = vsyncpa [#allocation6], 0
    %s24 = scalar_lea.sflag [#allocation6], 1
    %25 = vsyncpa %s24, 0
    %26 = vsyncpa [#allocation9], 0
    %27 = vsyncpa [#allocation12], 0
    %28 = vsyncpa [#allocation15], 0
    %29 = vsyncpa [#allocation4], 0
    %s30 = scalar_lea.sflag [#allocation4], 1
    %31 = vsyncpa %s30, 0
    %32 = vsyncpa [#allocation19], 0
    %s33 = scalar_lea.sflag [#allocation19], 1
    %34 = vsyncpa %s33, 0
    loop: start=0, step=1, limit=4
    $region2: #{tpu_custom_call.1} parent=1 // loop_pre_header
      _
    $region3: #{tpu_custom_call.1} parent=1 // loop_header
      %s36 = sphi 0, %s40
      %p37 = scmp.ge.s32.totalorder %s36, 4
      %s46 = sphi 0, %s48
      %s49 = sphi 0, %s46
      %s50 = sphi 0, %s49
      %s66 = sphi 0, %s50
      %s72 = sphi 0, %s74
      %s75 = sphi 0, %s72
      %s76 = sphi 0, %s75
      %s92 = sphi 0, %s76
      %s98 = sphi 0, %s100
      %s101 = sphi 0, %s98
      %s102 = sphi 0, %s101
      %s118 = sphi 0, %s102
      %s122 = sphi 0, %s122
      %s124 = sphi 0, %s122
      %s125 = sphi 0, %s124
      %s139 = sphi 0, %s125
      %s143 = sphi 0, %s143
      %s145 = sphi 0, %s143
      %s146 = sphi 0, %s145
      %s160 = sphi 0, %s146
      %s164 = sphi 0, %s164
      %s166 = sphi 0, %s164
      %s167 = sphi 0, %s166
      %s181 = sphi 0, %s167
      %s185 = sphi 0, %s185
      %s187 = sphi 0, %s185
      %s188 = sphi 0, %s187
      %s202 = sphi 0, %s188
      %s206 = sphi 0, %s206
      %s208 = sphi 0, %s206
      %s209 = sphi 0, %s208
      %s223 = sphi 0, %s209
      %s227 = sphi 0, %s227
      %s229 = sphi 0, %s227
      %s230 = sphi 0, %s229
      %s244 = sphi 0, %s230
      %s248 = sphi 0, %s248
      %s250 = sphi 0, %s248
      %s251 = sphi 0, %s250
      %s265 = sphi 0, %s251
      %s269 = sphi 0, %s269
      %s271 = sphi 0, %s269
      %s272 = sphi 0, %s271
      %s286 = sphi 0, %s272
      %s290 = sphi 0, %s290
      %s292 = sphi 0, %s290
      %s293 = sphi 0, %s292
      %s307 = sphi 0, %s293
      %s311 = sphi 0, %s311
      %s313 = sphi 0, %s311
      %s314 = sphi 0, %s313
      %s328 = sphi 0, %s314
      %s334 = sphi 0, %s336
      %s337 = sphi 0, %s334
      %s338 = sphi 0, %s337
      %s354 = sphi 0, %s338
      %s360 = sphi 0, %s362
      %s363 = sphi 0, %s360
      %s364 = sphi 0, %s363
      %s380 = sphi 0, %s364
    $region4: #{tpu_custom_call.1} parent=1 // loop_header_branch
      %39 = sbr.rel (%p37) target = $region8
    $region5: #{tpu_custom_call.1} parent=1 // loop_body
      %s41 = ssub.s32 %s36, 1
      %s42 = ssub.s32 %s36, 2
      %s43 = sadd.s32 %s36, 1
      %s44 = ssub.s32 %s36, %s43
      %p45 = scmp.eq.s32.totalorder %s44, 0
      %s47 = sadd.s32 %s46, 1
      %s48 = scalar_select %p45, %s46, %s47
      %p51 = pneg %p45
      %p52 = scmp.eq.s32.totalorder %s36, 1
      %p53 = por %p51, %p52
      %p54 = scmp.ne.s32.totalorder %s46, %s49
      %p55 = scmp.eq.s32.totalorder %s36, 0
      %p56 = por %p54, %p55
      %p57 = scmp.ne.s32.totalorder %s46, %s49
      %p58 = scmp.eq.s32.totalorder %s41, 1
      %p59 = por %p57, %p58
      %p60 = scmp.ne.s32.totalorder %s49, %s50
      %p61 = scmp.eq.s32.totalorder %s41, 0
      %p62 = por %p60, %p61
      %p63 = scmp.ne.s32.totalorder %s49, %s50
      %p64 = scmp.eq.s32.totalorder %s42, 1
      %p65 = por %p63, %p64
      %p67 = scmp.ne.s32.totalorder %s50, %s66
      %p68 = scmp.eq.s32.totalorder %s42, 0
      %p69 = por %p67, %p68
      %s70 = ssub.s32 %s36, %s43
      %p71 = scmp.eq.s32.totalorder %s70, 0
      %s73 = sadd.s32 %s72, 1
      %s74 = scalar_select %p71, %s72, %s73
      %p77 = pneg %p71
      %p78 = scmp.eq.s32.totalorder %s36, 1
      %p79 = por %p77, %p78
      %p80 = scmp.ne.s32.totalorder %s72, %s75
      %p81 = scmp.eq.s32.totalorder %s36, 0
      %p82 = por %p80, %p81
      %p83 = scmp.ne.s32.totalorder %s72, %s75
      %p84 = scmp.eq.s32.totalorder %s41, 1
      %p85 = por %p83, %p84
      %p86 = scmp.ne.s32.totalorder %s75, %s76
      %p87 = scmp.eq.s32.totalorder %s41, 0
      %p88 = por %p86, %p87
      %p89 = scmp.ne.s32.totalorder %s75, %s76
      %p90 = scmp.eq.s32.totalorder %s42, 1
      %p91 = por %p89, %p90
      %p93 = scmp.ne.s32.totalorder %s76, %s92
      %p94 = scmp.eq.s32.totalorder %s42, 0
      %p95 = por %p93, %p94
      %s96 = ssub.s32 %s36, %s43
      %p97 = scmp.eq.s32.totalorder %s96, 0
      %s99 = sadd.s32 %s98, 1
      %s100 = scalar_select %p97, %s98, %s99
      %p103 = pneg %p97
      %p104 = scmp.eq.s32.totalorder %s36, 1
      %p105 = por %p103, %p104
      %p106 = scmp.ne.s32.totalorder %s98, %s101
      %p107 = scmp.eq.s32.totalorder %s36, 0
      %p108 = por %p106, %p107
      %p109 = scmp.ne.s32.totalorder %s98, %s101
      %p110 = scmp.eq.s32.totalorder %s41, 1
      %p111 = por %p109, %p110
      %p112 = scmp.ne.s32.totalorder %s101, %s102
      %p113 = scmp.eq.s32.totalorder %s41, 0
      %p114 = por %p112, %p113
      %p115 = scmp.ne.s32.totalorder %s101, %s102
      %p116 = scmp.eq.s32.totalorder %s42, 1
      %p117 = por %p115, %p116
      %p119 = scmp.ne.s32.totalorder %s102, %s118
      %p120 = scmp.eq.s32.totalorder %s42, 0
      %p121 = por %p119, %p120
      %s123 = sadd.s32 %s122, 1
      %p126 = scmp.eq.s32.totalorder %s36, 1
      %p127 = scmp.ne.s32.totalorder %s122, %s124
      %p128 = scmp.eq.s32.totalorder %s36, 0
      %p129 = por %p127, %p128
      %p130 = scmp.ne.s32.totalorder %s122, %s124
      %p131 = scmp.eq.s32.totalorder %s41, 1
      %p132 = por %p130, %p131
      %p133 = scmp.ne.s32.totalorder %s124, %s125
      %p134 = scmp.eq.s32.totalorder %s41, 0
      %p135 = por %p133, %p134
      %p136 = scmp.ne.s32.totalorder %s124, %s125
      %p137 = scmp.eq.s32.totalorder %s42, 1
      %p138 = por %p136, %p137
      %p140 = scmp.ne.s32.totalorder %s125, %s139
      %p141 = scmp.eq.s32.totalorder %s42, 0
      %p142 = por %p140, %p141
      %s144 = sadd.s32 %s143, 1
      %p147 = scmp.eq.s32.totalorder %s36, 1
      %p148 = scmp.ne.s32.totalorder %s143, %s145
      %p149 = scmp.eq.s32.totalorder %s36, 0
      %p150 = por %p148, %p149
      %p151 = scmp.ne.s32.totalorder %s143, %s145
      %p152 = scmp.eq.s32.totalorder %s41, 1
      %p153 = por %p151, %p152
      %p154 = scmp.ne.s32.totalorder %s145, %s146
      %p155 = scmp.eq.s32.totalorder %s41, 0
      %p156 = por %p154, %p155
      %p157 = scmp.ne.s32.totalorder %s145, %s146
      %p158 = scmp.eq.s32.totalorder %s42, 1
      %p159 = por %p157, %p158
      %p161 = scmp.ne.s32.totalorder %s146, %s160
      %p162 = scmp.eq.s32.totalorder %s42, 0
      %p163 = por %p161, %p162
      %s165 = sadd.s32 %s164, 1
      %p168 = scmp.eq.s32.totalorder %s36, 1
      %p169 = scmp.ne.s32.totalorder %s164, %s166
      %p170 = scmp.eq.s32.totalorder %s36, 0
      %p171 = por %p169, %p170
      %p172 = scmp.ne.s32.totalorder %s164, %s166
      %p173 = scmp.eq.s32.totalorder %s41, 1
      %p174 = por %p172, %p173
      %p175 = scmp.ne.s32.totalorder %s166, %s167
      %p176 = scmp.eq.s32.totalorder %s41, 0
      %p177 = por %p175, %p176
      %p178 = scmp.ne.s32.totalorder %s166, %s167
      %p179 = scmp.eq.s32.totalorder %s42, 1
      %p180 = por %p178, %p179
      %p182 = scmp.ne.s32.totalorder %s167, %s181
      %p183 = scmp.eq.s32.totalorder %s42, 0
      %p184 = por %p182, %p183
      %s186 = sadd.s32 %s185, 1
      %p189 = scmp.eq.s32.totalorder %s36, 1
      %p190 = scmp.ne.s32.totalorder %s185, %s187
      %p191 = scmp.eq.s32.totalorder %s36, 0
      %p192 = por %p190, %p191
      %p193 = scmp.ne.s32.totalorder %s185, %s187
      %p194 = scmp.eq.s32.totalorder %s41, 1
      %p195 = por %p193, %p194
      %p196 = scmp.ne.s32.totalorder %s187, %s188
      %p197 = scmp.eq.s32.totalorder %s41, 0
      %p198 = por %p196, %p197
      %p199 = scmp.ne.s32.totalorder %s187, %s188
      %p200 = scmp.eq.s32.totalorder %s42, 1
      %p201 = por %p199, %p200
      %p203 = scmp.ne.s32.totalorder %s188, %s202
      %p204 = scmp.eq.s32.totalorder %s42, 0
      %p205 = por %p203, %p204
      %s207 = sadd.s32 %s206, 1
      %p210 = scmp.eq.s32.totalorder %s36, 1
      %p211 = scmp.ne.s32.totalorder %s206, %s208
      %p212 = scmp.eq.s32.totalorder %s36, 0
      %p213 = por %p211, %p212
      %p214 = scmp.ne.s32.totalorder %s206, %s208
      %p215 = scmp.eq.s32.totalorder %s41, 1
      %p216 = por %p214, %p215
      %p217 = scmp.ne.s32.totalorder %s208, %s209
      %p218 = scmp.eq.s32.totalorder %s41, 0
      %p219 = por %p217, %p218
      %p220 = scmp.ne.s32.totalorder %s208, %s209
      %p221 = scmp.eq.s32.totalorder %s42, 1
      %p222 = por %p220, %p221
      %p224 = scmp.ne.s32.totalorder %s209, %s223
      %p225 = scmp.eq.s32.totalorder %s42, 0
      %p226 = por %p224, %p225
      %s228 = sadd.s32 %s227, 1
      %p231 = scmp.eq.s32.totalorder %s36, 1
      %p232 = scmp.ne.s32.totalorder %s227, %s229
      %p233 = scmp.eq.s32.totalorder %s36, 0
      %p234 = por %p232, %p233
      %p235 = scmp.ne.s32.totalorder %s227, %s229
      %p236 = scmp.eq.s32.totalorder %s41, 1
      %p237 = por %p235, %p236
      %p238 = scmp.ne.s32.totalorder %s229, %s230
      %p239 = scmp.eq.s32.totalorder %s41, 0
      %p240 = por %p238, %p239
      %p241 = scmp.ne.s32.totalorder %s229, %s230
      %p242 = scmp.eq.s32.totalorder %s42, 1
      %p243 = por %p241, %p242
      %p245 = scmp.ne.s32.totalorder %s230, %s244
      %p246 = scmp.eq.s32.totalorder %s42, 0
      %p247 = por %p245, %p246
      %s249 = sadd.s32 %s248, 1
      %p252 = scmp.eq.s32.totalorder %s36, 1
      %p253 = scmp.ne.s32.totalorder %s248, %s250
      %p254 = scmp.eq.s32.totalorder %s36, 0
      %p255 = por %p253, %p254
      %p256 = scmp.ne.s32.totalorder %s248, %s250
      %p257 = scmp.eq.s32.totalorder %s41, 1
      %p258 = por %p256, %p257
      %p259 = scmp.ne.s32.totalorder %s250, %s251
      %p260 = scmp.eq.s32.totalorder %s41, 0
      %p261 = por %p259, %p260
      %p262 = scmp.ne.s32.totalorder %s250, %s251
      %p263 = scmp.eq.s32.totalorder %s42, 1
      %p264 = por %p262, %p263
      %p266 = scmp.ne.s32.totalorder %s251, %s265
      %p267 = scmp.eq.s32.totalorder %s42, 0
      %p268 = por %p266, %p267
      %s270 = sadd.s32 %s269, 1
      %p273 = scmp.eq.s32.totalorder %s36, 1
      %p274 = scmp.ne.s32.totalorder %s269, %s271
      %p275 = scmp.eq.s32.totalorder %s36, 0
      %p276 = por %p274, %p275
      %p277 = scmp.ne.s32.totalorder %s269, %s271
      %p278 = scmp.eq.s32.totalorder %s41, 1
      %p279 = por %p277, %p278
      %p280 = scmp.ne.s32.totalorder %s271, %s272
      %p281 = scmp.eq.s32.totalorder %s41, 0
      %p282 = por %p280, %p281
      %p283 = scmp.ne.s32.totalorder %s271, %s272
      %p284 = scmp.eq.s32.totalorder %s42, 1
      %p285 = por %p283, %p284
      %p287 = scmp.ne.s32.totalorder %s272, %s286
      %p288 = scmp.eq.s32.totalorder %s42, 0
      %p289 = por %p287, %p288
      %s291 = sadd.s32 %s290, 1
      %p294 = scmp.eq.s32.totalorder %s36, 1
      %p295 = scmp.ne.s32.totalorder %s290, %s292
      %p296 = scmp.eq.s32.totalorder %s36, 0
      %p297 = por %p295, %p296
      %p298 = scmp.ne.s32.totalorder %s290, %s292
      %p299 = scmp.eq.s32.totalorder %s41, 1
      %p300 = por %p298, %p299
      %p301 = scmp.ne.s32.totalorder %s292, %s293
      %p302 = scmp.eq.s32.totalorder %s41, 0
      %p303 = por %p301, %p302
      %p304 = scmp.ne.s32.totalorder %s292, %s293
      %p305 = scmp.eq.s32.totalorder %s42, 1
      %p306 = por %p304, %p305
      %p308 = scmp.ne.s32.totalorder %s293, %s307
      %p309 = scmp.eq.s32.totalorder %s42, 0
      %p310 = por %p308, %p309
      %s312 = sadd.s32 %s311, 1
      %p315 = scmp.eq.s32.totalorder %s36, 1
      %p316 = scmp.ne.s32.totalorder %s311, %s313
      %p317 = scmp.eq.s32.totalorder %s36, 0
      %p318 = por %p316, %p317
      %p319 = scmp.ne.s32.totalorder %s311, %s313
      %p320 = scmp.eq.s32.totalorder %s41, 1
      %p321 = por %p319, %p320
      %p322 = scmp.ne.s32.totalorder %s313, %s314
      %p323 = scmp.eq.s32.totalorder %s41, 0
      %p324 = por %p322, %p323
      %p325 = scmp.ne.s32.totalorder %s313, %s314
      %p326 = scmp.eq.s32.totalorder %s42, 1
      %p327 = por %p325, %p326
      %p329 = scmp.ne.s32.totalorder %s314, %s328
      %p330 = scmp.eq.s32.totalorder %s42, 0
      %p331 = por %p329, %p330
      %s332 = ssub.s32 %s36, %s43
      %p333 = scmp.eq.s32.totalorder %s332, 0
      %s335 = sadd.s32 %s334, 1
      %s336 = scalar_select %p333, %s334, %s335
      %p339 = pneg %p333
      %p340 = scmp.eq.s32.totalorder %s36, 1
      %p341 = por %p339, %p340
      %p342 = scmp.ne.s32.totalorder %s334, %s337
      %p343 = scmp.eq.s32.totalorder %s36, 0
      %p344 = por %p342, %p343
      %p345 = scmp.ne.s32.totalorder %s334, %s337
      %p346 = scmp.eq.s32.totalorder %s41, 1
      %p347 = por %p345, %p346
      %p348 = scmp.ne.s32.totalorder %s337, %s338
      %p349 = scmp.eq.s32.totalorder %s41, 0
      %p350 = por %p348, %p349
      %p351 = scmp.ne.s32.totalorder %s337, %s338
      %p352 = scmp.eq.s32.totalorder %s42, 1
      %p353 = por %p351, %p352
      %p355 = scmp.ne.s32.totalorder %s338, %s354
      %p356 = scmp.eq.s32.totalorder %s42, 0
      %p357 = por %p355, %p356
      %s358 = ssub.s32 %s36, %s43
      %p359 = scmp.eq.s32.totalorder %s358, 0
      %s361 = sadd.s32 %s360, 1
      %s362 = scalar_select %p359, %s360, %s361
      %p365 = pneg %p359
      %p366 = scmp.eq.s32.totalorder %s36, 1
      %p367 = por %p365, %p366
      %p368 = scmp.ne.s32.totalorder %s360, %s363
      %p369 = scmp.eq.s32.totalorder %s36, 0
      %p370 = por %p368, %p369
      %p371 = scmp.ne.s32.totalorder %s360, %s363
      %p372 = scmp.eq.s32.totalorder %s41, 1
      %p373 = por %p371, %p372
      %p374 = scmp.ne.s32.totalorder %s363, %s364
      %p375 = scmp.eq.s32.totalorder %s41, 0
      %p376 = por %p374, %p375
      %p377 = scmp.ne.s32.totalorder %s363, %s364
      %p378 = scmp.eq.s32.totalorder %s42, 1
      %p379 = por %p377, %p378
      %p381 = scmp.ne.s32.totalorder %s364, %s380
      %p382 = scmp.eq.s32.totalorder %s42, 0
      %p383 = por %p381, %p382
      %p384 = scmp.le.s32.totalorder 1, %s36
      %p385 = scmp.lt.s32.totalorder %s36, 3
      %p386 = pnand %p384, %p385
      %p387 = pneg %p386
      // Predicated region
      $region9: #{tpu_custom_call.1} parent=5 // pred_check
        _
      $region10: #{tpu_custom_call.1} parent=5 // pred_check_branch
        %389 = sbr.rel (%p386) target = $region12
      $region11: #{tpu_custom_call.1} parent=5 // pred_region
        %s390 = ssub.s32 %s36, 1
        // Predicated region
        $region13: #{tpu_custom_call.1} parent=11 // pred_check
          %p391 = pneg %p135
        $region14: #{tpu_custom_call.1} parent=11 // pred_check_branch
          %393 = sbr.rel (%p391) target = $region16
        $region15: #{tpu_custom_call.1} parent=11 // pred_region
          %s395 = ssub.s32 256, 256
          %396 = vsyncadd [#allocation9], %s395
          %s397 = sshll.u32 [#allocation8], 4
          %s398 = int_to_ptr.vmem [resolvable:$true] %s397
          %403 = dma.hbm_to_vmem [thread:$0]  %s3, 256, %s398, [#allocation9], 64, 64, 4
        $region16: #{tpu_custom_call.1} parent=11 // pred_fallthru
          _
        // Predicated region
        $region17: #{tpu_custom_call.1} parent=11 // pred_check
          %p404 = pneg %p156
        $region18: #{tpu_custom_call.1} parent=11 // pred_check_branch
          %406 = sbr.rel (%p404) target = $region20
        $region19: #{tpu_custom_call.1} parent=11 // pred_region
          %s408 = ssub.s32 16, 16
          %409 = vsyncadd [#allocation9], %s408
          %s411 = sshll.u32 [#allocation10], 4
          %s412 = int_to_ptr.vmem [resolvable:$true] %s411
          %414 = dma.hbm_to_vmem [thread:$0]  %s4, 16, %s412, [#allocation9]
        $region20: #{tpu_custom_call.1} parent=11 // pred_fallthru
          _
        // Predicated region
        $region21: #{tpu_custom_call.1} parent=11 // pred_check
          %p415 = pneg %p177
        $region22: #{tpu_custom_call.1} parent=11 // pred_check_branch
          %417 = sbr.rel (%p415) target = $region24
        $region23: #{tpu_custom_call.1} parent=11 // pred_region
          %s419 = ssub.s32 256, 256
          %420 = vsyncadd [#allocation12], %s419
          %s421 = sshll.u32 [#allocation11], 4
          %s422 = int_to_ptr.vmem [resolvable:$true] %s421
          %427 = dma.hbm_to_vmem [thread:$0]  %s5, 256, %s422, [#allocation12], 64, 64, 4
        $region24: #{tpu_custom_call.1} parent=11 // pred_fallthru
          _
        // Predicated region
        $region25: #{tpu_custom_call.1} parent=11 // pred_check
          %p428 = pneg %p198
        $region26: #{tpu_custom_call.1} parent=11 // pred_check_branch
          %430 = sbr.rel (%p428) target = $region28
        $region27: #{tpu_custom_call.1} parent=11 // pred_region
          %s432 = ssub.s32 16, 16
          %433 = vsyncadd [#allocation12], %s432
          %s435 = sshll.u32 [#allocation13], 4
          %s436 = int_to_ptr.vmem [resolvable:$true] %s435
          %438 = dma.hbm_to_vmem [thread:$0]  %s6, 16, %s436, [#allocation12]
        $region28: #{tpu_custom_call.1} parent=11 // pred_fallthru
          _
        // Predicated region
        $region29: #{tpu_custom_call.1} parent=11 // pred_check
          %p439 = pneg %p219
        $region30: #{tpu_custom_call.1} parent=11 // pred_check_branch
          %441 = sbr.rel (%p439) target = $region32
        $region31: #{tpu_custom_call.1} parent=11 // pred_region
          %s443 = ssub.s32 256, 256
          %444 = vsyncadd [#allocation15], %s443
          %s445 = sshll.u32 [#allocation14], 4
          %s446 = int_to_ptr.vmem [resolvable:$true] %s445
          %451 = dma.hbm_to_vmem [thread:$0]  %s7, 256, %s446, [#allocation15], 64, 64, 4
        $region32: #{tpu_custom_call.1} parent=11 // pred_fallthru
          _
        // Predicated region
        $region33: #{tpu_custom_call.1} parent=11 // pred_check
          %p452 = pneg %p240
        $region34: #{tpu_custom_call.1} parent=11 // pred_check_branch
          %454 = sbr.rel (%p452) target = $region36
        $region35: #{tpu_custom_call.1} parent=11 // pred_region
          %s456 = ssub.s32 16, 16
          %457 = vsyncadd [#allocation15], %s456
          %s459 = sshll.u32 [#allocation16], 4
          %s460 = int_to_ptr.vmem [resolvable:$true] %s459
          %462 = dma.hbm_to_vmem [thread:$0]  %s8, 16, %s460, [#allocation15]
        $region36: #{tpu_custom_call.1} parent=11 // pred_fallthru
          _
        // Predicated region
        $region37: #{tpu_custom_call.1} parent=11 // pred_check
          %p463 = pneg %p261
        $region38: #{tpu_custom_call.1} parent=11 // pred_check_branch
          %465 = sbr.rel (%p463) target = $region40
        $region39: #{tpu_custom_call.1} parent=11 // pred_region
          _
        $region40: #{tpu_custom_call.1} parent=11 // pred_fallthru
          _
        // Predicated region
        $region41: #{tpu_custom_call.1} parent=11 // pred_check
          %p466 = pneg %p282
        $region42: #{tpu_custom_call.1} parent=11 // pred_check_branch
          %468 = sbr.rel (%p466) target = $region44
        $region43: #{tpu_custom_call.1} parent=11 // pred_region
          _
        $region44: #{tpu_custom_call.1} parent=11 // pred_fallthru
          _
        // Predicated region
        $region45: #{tpu_custom_call.1} parent=11 // pred_check
          %p469 = pneg %p303
        $region46: #{tpu_custom_call.1} parent=11 // pred_check_branch
          %471 = sbr.rel (%p469) target = $region48
        $region47: #{tpu_custom_call.1} parent=11 // pred_region
          _
        $region48: #{tpu_custom_call.1} parent=11 // pred_fallthru
          _
        // Predicated region
        $region49: #{tpu_custom_call.1} parent=11 // pred_check
          %p472 = pneg %p324
        $region50: #{tpu_custom_call.1} parent=11 // pred_check_branch
          %474 = sbr.rel (%p472) target = $region52
        $region51: #{tpu_custom_call.1} parent=11 // pred_region
          _
        $region52: #{tpu_custom_call.1} parent=11 // pred_fallthru
          _
      $region12: #{tpu_custom_call.1} parent=5 // pred_fallthru
        _
      %p475 = scmp.lt.s32.totalorder %s36, 2
      // Predicated region
      $region53: #{tpu_custom_call.1} parent=5 // pred_check
        %p476 = pneg %p475
      $region54: #{tpu_custom_call.1} parent=5 // pred_check_branch
        %478 = sbr.rel (%p476) target = $region56
      $region55: #{tpu_custom_call.1} parent=5 // pred_region
        // Predicated region
        $region57: #{tpu_custom_call.1} parent=55 // pred_check
          %p479 = pneg %p56
        $region58: #{tpu_custom_call.1} parent=55 // pred_check_branch
          %481 = sbr.rel (%p479) target = $region60
        $region59: #{tpu_custom_call.1} parent=55 // pred_region
          %s482 = sand.u32 %s46, 1
          %s483 = scalar_lea.sflag [#allocation3], %s482
          %s484 = sand.u32 %s46, 1
          %s485 = smul.addr %s484, 8
          %s486 = scalar_lea.vmem [#allocation2], %s485
          %s488 = ssub.s32 128, 128
          %489 = vsyncadd %s483, %s488
          %s490 = smul.addr %s36, 128
          %s491 = scalar_lea.hbm %s0, %s490
          %s493 = sshll.u32 %s486, 4
          %s494 = int_to_ptr.vmem [resolvable:$true] %s493
          %496 = dma.hbm_to_vmem [thread:$0]  %s491, 128, %s494, %s483
        $region60: #{tpu_custom_call.1} parent=55 // pred_fallthru
          _
        // Predicated region
        $region61: #{tpu_custom_call.1} parent=55 // pred_check
          %p497 = pneg %p82
        $region62: #{tpu_custom_call.1} parent=55 // pred_check_branch
          %499 = sbr.rel (%p497) target = $region64
        $region63: #{tpu_custom_call.1} parent=55 // pred_region
          %s500 = sand.u32 %s36, 1
          %s501 = scalar_lea.sflag [#allocation6], %s500
          %s502 = sand.u32 %s72, 1
          %s503 = smul.addr %s502, 8
          %s504 = scalar_lea.vmem [#allocation5], %s503
          %s506 = ssub.s32 128, 128
          %507 = vsyncadd %s501, %s506
          %s508 = smul.addr %s36, 128
          %s509 = scalar_lea.hbm %s1, %s508
          %s511 = sshll.u32 %s504, 4
          %s512 = int_to_ptr.vmem [resolvable:$true] %s511
          %514 = dma.hbm_to_vmem [thread:$0]  %s509, 128, %s512, %s501
        $region64: #{tpu_custom_call.1} parent=55 // pred_fallthru
          _
        // Predicated region
        $region65: #{tpu_custom_call.1} parent=55 // pred_check
          %p515 = pneg %p108
        $region66: #{tpu_custom_call.1} parent=55 // pred_check_branch
          %517 = sbr.rel (%p515) target = $region68
        $region67: #{tpu_custom_call.1} parent=55 // pred_region
          %s518 = sand.u32 %s36, 1
          %s519 = scalar_lea.sflag [#allocation6], %s518
          %s520 = sand.u32 %s98, 1
          %s521 = smul.addr %s520, 8
          %s522 = scalar_lea.vmem [#allocation7], %s521
          %s524 = ssub.s32 128, 128
          %525 = vsyncadd %s519, %s524
          %s526 = smul.addr %s36, 128
          %s527 = scalar_lea.hbm %s2, %s526
          %s529 = sshll.u32 %s522, 4
          %s530 = int_to_ptr.vmem [resolvable:$true] %s529
          %532 = dma.hbm_to_vmem [thread:$0]  %s527, 128, %s530, %s519
        $region68: #{tpu_custom_call.1} parent=55 // pred_fallthru
          _
      $region56: #{tpu_custom_call.1} parent=5 // pred_fallthru
        _
      %p533 = scmp.le.s32.totalorder 1, %s36
      %p534 = scmp.lt.s32.totalorder %s36, 3
      %p535 = pnand %p533, %p534
      %p536 = pneg %p535
      // Predicated region
      $region69: #{tpu_custom_call.1} parent=5 // pred_check
        _
      $region70: #{tpu_custom_call.1} parent=5 // pred_check_branch
        %538 = sbr.rel (%p535) target = $region72
      $region71: #{tpu_custom_call.1} parent=5 // pred_region
        %s539 = ssub.s32 %s36, 1
        %s540 = sand.u32 %s49, 1
        %s541 = scalar_lea.sflag [#allocation3], %s540
        %s542 = sand.u32 %s49, 1
        %s543 = smul.addr %s542, 8
        %s544 = scalar_lea.vmem [#allocation2], %s543
        // Predicated region
        $region73: #{tpu_custom_call.1} parent=71 // pred_check
          %p545 = pneg %p62
        $region74: #{tpu_custom_call.1} parent=71 // pred_check_branch
          %547 = sbr.rel (%p545) target = $region76
        $region75: #{tpu_custom_call.1} parent=71 // pred_region
          %548 = dma.done %s541, 128
        $region76: #{tpu_custom_call.1} parent=71 // pred_fallthru
          _
        %s549 = sand.u32 %s41, 1
        %s550 = scalar_lea.sflag [#allocation6], %s549
        %s551 = sand.u32 %s75, 1
        %s552 = smul.addr %s551, 8
        %s553 = scalar_lea.vmem [#allocation5], %s552
        // Predicated region
        $region77: #{tpu_custom_call.1} parent=71 // pred_check
          %p554 = pneg %p88
        $region78: #{tpu_custom_call.1} parent=71 // pred_check_branch
          %556 = sbr.rel (%p554) target = $region80
        $region79: #{tpu_custom_call.1} parent=71 // pred_region
          %557 = dma.done %s550, 128
        $region80: #{tpu_custom_call.1} parent=71 // pred_fallthru
          _
        %s558 = sand.u32 %s41, 1
        %s559 = scalar_lea.sflag [#allocation6], %s558
        %s560 = sand.u32 %s101, 1
        %s561 = smul.addr %s560, 8
        %s562 = scalar_lea.vmem [#allocation7], %s561
        // Predicated region
        $region81: #{tpu_custom_call.1} parent=71 // pred_check
          %p563 = pneg %p114
        $region82: #{tpu_custom_call.1} parent=71 // pred_check_branch
          %565 = sbr.rel (%p563) target = $region84
        $region83: #{tpu_custom_call.1} parent=71 // pred_region
          %566 = dma.done %s559, 128
        $region84: #{tpu_custom_call.1} parent=71 // pred_fallthru
          _
        // Predicated region
        $region85: #{tpu_custom_call.1} parent=71 // pred_check
          %p567 = pneg %p135
        $region86: #{tpu_custom_call.1} parent=71 // pred_check_branch
          %569 = sbr.rel (%p567) target = $region88
        $region87: #{tpu_custom_call.1} parent=71 // pred_region
          %570 = dma.done [#allocation9], 256
        $region88: #{tpu_custom_call.1} parent=71 // pred_fallthru
          _
        // Predicated region
        $region89: #{tpu_custom_call.1} parent=71 // pred_check
          %p571 = pneg %p156
        $region90: #{tpu_custom_call.1} parent=71 // pred_check_branch
          %573 = sbr.rel (%p571) target = $region92
        $region91: #{tpu_custom_call.1} parent=71 // pred_region
          %574 = dma.done [#allocation9], 16
        $region92: #{tpu_custom_call.1} parent=71 // pred_fallthru
          _
        // Predicated region
        $region93: #{tpu_custom_call.1} parent=71 // pred_check
          %p575 = pneg %p177
        $region94: #{tpu_custom_call.1} parent=71 // pred_check_branch
          %577 = sbr.rel (%p575) target = $region96
        $region95: #{tpu_custom_call.1} parent=71 // pred_region
          %578 = dma.done [#allocation12], 256
        $region96: #{tpu_custom_call.1} parent=71 // pred_fallthru
          _
        // Predicated region
        $region97: #{tpu_custom_call.1} parent=71 // pred_check
          %p579 = pneg %p198
        $region98: #{tpu_custom_call.1} parent=71 // pred_check_branch
          %581 = sbr.rel (%p579) target = $region100
        $region99: #{tpu_custom_call.1} parent=71 // pred_region
          %582 = dma.done [#allocation12], 16
        $region100: #{tpu_custom_call.1} parent=71 // pred_fallthru
          _
        // Predicated region
        $region101: #{tpu_custom_call.1} parent=71 // pred_check
          %p583 = pneg %p219
        $region102: #{tpu_custom_call.1} parent=71 // pred_check_branch
          %585 = sbr.rel (%p583) target = $region104
        $region103: #{tpu_custom_call.1} parent=71 // pred_region
          %586 = dma.done [#allocation15], 256
        $region104: #{tpu_custom_call.1} parent=71 // pred_fallthru
          _
        // Predicated region
        $region105: #{tpu_custom_call.1} parent=71 // pred_check
          %p587 = pneg %p240
        $region106: #{tpu_custom_call.1} parent=71 // pred_check_branch
          %589 = sbr.rel (%p587) target = $region108
        $region107: #{tpu_custom_call.1} parent=71 // pred_region
          %590 = dma.done [#allocation15], 16
        $region108: #{tpu_custom_call.1} parent=71 // pred_fallthru
          _
        %s591 = sand.u32 %s49, 1
        %s592 = scalar_lea.sflag [#allocation3], %s591
        %s593 = sand.u32 %s49, 1
        %s594 = smul.addr %s593, 8
        %s595 = scalar_lea.vmem [#allocation2], %s594
        %p596 = pneg %p62
        %p597 = pneg %p59
        %s598 = sand.u32 %s41, 1
        %s599 = scalar_lea.sflag [#allocation6], %s598
        %s600 = sand.u32 %s75, 1
        %s601 = smul.addr %s600, 8
        %s602 = scalar_lea.vmem [#allocation5], %s601
        %p603 = pneg %p88
        %p604 = pneg %p85
        %s605 = sand.u32 %s41, 1
        %s606 = scalar_lea.sflag [#allocation6], %s605
        %s607 = sand.u32 %s101, 1
        %s608 = smul.addr %s607, 8
        %s609 = scalar_lea.vmem [#allocation7], %s608
        %p610 = pneg %p114
        %p611 = pneg %p111
        %p612 = pneg %p135
        %p613 = pneg %p132
        %p614 = pneg %p156
        %p615 = pneg %p153
        %p616 = pneg %p177
        %p617 = pneg %p174
        %p618 = pneg %p198
        %p619 = pneg %p195
        %p620 = pneg %p219
        %p621 = pneg %p216
        %p622 = pneg %p240
        %p623 = pneg %p237
        %p624 = pneg %p261
        %p625 = pneg %p258
        %p626 = pneg %p282
        %p627 = pneg %p279
        %p628 = pneg %p303
        %p629 = pneg %p300
        %p630 = pneg %p324
        %p631 = pneg %p321
        %p632 = pneg %p350
        %p633 = pneg %p347
        %s634 = sand.u32 %s337, 1
        %s635 = scalar_lea.sflag [#allocation4], %s634
        %s636 = sand.u32 %s337, 1
        %s637 = smul.addr %s636, 8
        %s638 = scalar_lea.vmem [#allocation17], %s637
        %p639 = pneg %p376
        %p640 = pneg %p373
        %s641 = sand.u32 %s363, 1
        %s642 = scalar_lea.sflag [#allocation19], %s641
        %s643 = sand.u32 %s363, 1
        %s644 = smul.addr %s643, 32
        %s645 = scalar_lea.vmem [#allocation18], %s644
        %v647 = vld [vmem:[%s544] sm:$0xff]
        %v648 = vld [vmem:[%s553] sm:$0xff]
        %v649 = vld [vmem:[%s562] sm:$0xff]
        %v650 = vpack.c.bf16 %v647, %v647
        %v651 = vld [vmem:[#allocation8] sm:$0xf]
        %v652 = vld [vmem:[#allocation8 + $0x4] sm:$0xf]
        %v653 = vld [vmem:[#allocation8 + $0x8] sm:$0xf]
        %v654 = vld [vmem:[#allocation8 + $0xc] sm:$0xf]
        %v655 = vld [vmem:[#allocation10] sm:$0x1]
        %v657 = vlaneseq
        %v658 = vshrl.u32 %v657, 7
        %v659 = vsub.s32 0, %v658
        %v660 = vrot.slane %v655, %v659
        %v666 = vunpack.c.l.b16 %v651
        %v667 = vunpack.c.l.b16 %v652
        %v668 = vunpack.c.l.b16 %v653
        %v669 = vunpack.c.l.b16 %v654
        %v670 = vpack.c.b16 %v667, %v666
        %v671 = vpack.c.b16 %v669, %v668
        %vm674 = vcmask 261120
        %v676 = vsel %vm674, %v650, 0
        %678 = vmatprep.subr.bf16.mxu0 0
        %679 = vmatpush1.bf16.msra.mxu0 0
        %680 = vmatprep.subr.bf16.mxu0 0
        %681 = vmatpush1.bf16.msra.mxu0 0
        %682 = vmatprep.subr.bf16.mxu0 0
        %683 = vmatpush1.bf16.msra.mxu0 0
        %684 = vmatprep.subr.bf16.mxu0 0
        %685 = vmatpush1.bf16.msra.mxu0 0
        %686 = vmatprep.subr.bf16.mxu0 0
        %687 = vmatpush1.bf16.msra.mxu0 0
        %688 = vmatprep.subr.bf16.mxu0 0
        %689 = vmatpush1.bf16.msra.mxu0 0
        %690 = vmatprep.subr.bf16.mxu0 0
        %691 = vmatpush1.bf16.msra.mxu0 %v671
        %692 = vmatprep.subr.bf16.mxu0 0
        %693 = vmatpush1.bf16.msra.mxu0 %v670
        %694 = vmatprep.subr.bf16.mxu0 0
        %695 = vmatpush2.bf16.msra.mxu0 0
        %696 = vmatprep.subr.bf16.mxu0 0
        %697 = vmatpush2.bf16.msra.mxu0 0
        %698 = vmatprep.subr.bf16.mxu0 0
        %699 = vmatpush2.bf16.msra.mxu0 0
        %700 = vmatprep.subr.bf16.mxu0 0
        %701 = vmatpush2.bf16.msra.mxu0 0
        %702 = vmatprep.subr.bf16.mxu0 0
        %703 = vmatpush2.bf16.msra.mxu0 0
        %704 = vmatprep.subr.bf16.mxu0 0
        %705 = vmatpush2.bf16.msra.mxu0 0
        %706 = vmatprep.subr.bf16.mxu0 0
        %707 = vmatpush2.bf16.msra.mxu0 0
        %708 = vmatprep.subr.bf16.mxu0 0
        %709 = vmatpush2.bf16.msra.mxu0 0
        %710 = vmatprep.mubr.bf16.mxu0 0
        %711 = vmatmul.mubr.bf16.gmra.mxu0 %v676
        %v712 = vpop.f32.mrf.mxu0
        %v713 = vadd.f32 %v660, %v712
        %v714 = vpop.f32.mrf.mxu0
        %v715 = vpop.f32.mrf.mxu0
        %v716 = vpop.f32.mrf.mxu0
        %717 = vdwg.mxu0
        %v718 = vpack.c.bf16 %v648, %v648
        %v719 = vld [vmem:[#allocation11] sm:$0xf]
        %v720 = vld [vmem:[#allocation11 + $0x4] sm:$0xf]
        %v721 = vld [vmem:[#allocation11 + $0x8] sm:$0xf]
        %v722 = vld [vmem:[#allocation11 + $0xc] sm:$0xf]
        %v723 = vld [vmem:[#allocation13] sm:$0x1]
        %v725 = vlaneseq
        %v726 = vshrl.u32 %v725, 7
        %v727 = vsub.s32 0, %v726
        %v728 = vrot.slane %v723, %v727
        %v734 = vunpack.c.l.b16 %v719
        %v735 = vunpack.c.l.b16 %v720
        %v736 = vunpack.c.l.b16 %v721
        %v737 = vunpack.c.l.b16 %v722
        %v738 = vpack.c.b16 %v735, %v734
        %v739 = vpack.c.b16 %v737, %v736
        %v743 = vsel %vm674, %v718, 0
        %745 = vmatprep.subr.bf16.mxu0 0
        %746 = vmatpush1.bf16.msra.mxu0 0
        %747 = vmatprep.subr.bf16.mxu0 0
        %748 = vmatpush1.bf16.msra.mxu0 0
        %749 = vmatprep.subr.bf16.mxu0 0
        %750 = vmatpush1.bf16.msra.mxu0 0
        %751 = vmatprep.subr.bf16.mxu0 0
        %752 = vmatpush1.bf16.msra.mxu0 0
        %753 = vmatprep.subr.bf16.mxu0 0
        %754 = vmatpush1.bf16.msra.mxu0 0
        %755 = vmatprep.subr.bf16.mxu0 0
        %756 = vmatpush1.bf16.msra.mxu0 0
        %757 = vmatprep.subr.bf16.mxu0 0
        %758 = vmatpush1.bf16.msra.mxu0 %v739
        %759 = vmatprep.subr.bf16.mxu0 0
        %760 = vmatpush1.bf16.msra.mxu0 %v738
        %761 = vmatprep.subr.bf16.mxu0 0
        %762 = vmatpush2.bf16.msra.mxu0 0
        %763 = vmatprep.subr.bf16.mxu0 0
        %764 = vmatpush2.bf16.msra.mxu0 0
        %765 = vmatprep.subr.bf16.mxu0 0
        %766 = vmatpush2.bf16.msra.mxu0 0
        %767 = vmatprep.subr.bf16.mxu0 0
        %768 = vmatpush2.bf16.msra.mxu0 0
        %769 = vmatprep.subr.bf16.mxu0 0
        %770 = vmatpush2.bf16.msra.mxu0 0
        %771 = vmatprep.subr.bf16.mxu0 0
        %772 = vmatpush2.bf16.msra.mxu0 0
        %773 = vmatprep.subr.bf16.mxu0 0
        %774 = vmatpush2.bf16.msra.mxu0 0
        %775 = vmatprep.subr.bf16.mxu0 0
        %776 = vmatpush2.bf16.msra.mxu0 0
        %777 = vmatprep.mubr.bf16.mxu0 0
        %778 = vmatmul.mubr.bf16.gmra.mxu0 %v743
        %v779 = vpop.f32.mrf.mxu0
        %v780 = vadd.f32 %v728, %v779
        %v781 = vpop.f32.mrf.mxu0
        %v782 = vpop.f32.mrf.mxu0
        %v783 = vpop.f32.mrf.mxu0
        %784 = vdwg.mxu0
        %v785 = vpack.c.bf16 %v649, %v649
        %v786 = vld [vmem:[#allocation14] sm:$0xf]
        %v787 = vld [vmem:[#allocation14 + $0x4] sm:$0xf]
        %v788 = vld [vmem:[#allocation14 + $0x8] sm:$0xf]
        %v789 = vld [vmem:[#allocation14 + $0xc] sm:$0xf]
        %v790 = vld [vmem:[#allocation16] sm:$0x1]
        %v792 = vlaneseq
        %v793 = vshrl.u32 %v792, 7
        %v794 = vsub.s32 0, %v793
        %v795 = vrot.slane %v790, %v794
        %v801 = vunpack.c.l.b16 %v786
        %v802 = vunpack.c.l.b16 %v787
        %v803 = vunpack.c.l.b16 %v788
        %v804 = vunpack.c.l.b16 %v789
        %v805 = vpack.c.b16 %v802, %v801
        %v806 = vpack.c.b16 %v804, %v803
        %v810 = vsel %vm674, %v785, 0
        %812 = vmatprep.subr.bf16.mxu0 0
        %813 = vmatpush1.bf16.msra.mxu0 0
        %814 = vmatprep.subr.bf16.mxu0 0
        %815 = vmatpush1.bf16.msra.mxu0 0
        %816 = vmatprep.subr.bf16.mxu0 0
        %817 = vmatpush1.bf16.msra.mxu0 0
        %818 = vmatprep.subr.bf16.mxu0 0
        %819 = vmatpush1.bf16.msra.mxu0 0
        %820 = vmatprep.subr.bf16.mxu0 0
        %821 = vmatpush1.bf16.msra.mxu0 0
        %822 = vmatprep.subr.bf16.mxu0 0
        %823 = vmatpush1.bf16.msra.mxu0 0
        %824 = vmatprep.subr.bf16.mxu0 0
        %825 = vmatpush1.bf16.msra.mxu0 %v806
        %826 = vmatprep.subr.bf16.mxu0 0
        %827 = vmatpush1.bf16.msra.mxu0 %v805
        %828 = vmatprep.subr.bf16.mxu0 0
        %829 = vmatpush2.bf16.msra.mxu0 0
        %830 = vmatprep.subr.bf16.mxu0 0
        %831 = vmatpush2.bf16.msra.mxu0 0
        %832 = vmatprep.subr.bf16.mxu0 0
        %833 = vmatpush2.bf16.msra.mxu0 0
        %834 = vmatprep.subr.bf16.mxu0 0
        %835 = vmatpush2.bf16.msra.mxu0 0
        %836 = vmatprep.subr.bf16.mxu0 0
        %837 = vmatpush2.bf16.msra.mxu0 0
        %838 = vmatprep.subr.bf16.mxu0 0
        %839 = vmatpush2.bf16.msra.mxu0 0
        %840 = vmatprep.subr.bf16.mxu0 0
        %841 = vmatpush2.bf16.msra.mxu0 0
        %842 = vmatprep.subr.bf16.mxu0 0
        %843 = vmatpush2.bf16.msra.mxu0 0
        %844 = vmatprep.mubr.bf16.mxu0 0
        %845 = vmatmul.mubr.bf16.gmra.mxu0 %v810
        %v846 = vpop.f32.mrf.mxu0
        %v847 = vadd.f32 %v795, %v846
        %v848 = vpop.f32.mrf.mxu0
        %v849 = vpop.f32.mrf.mxu0
        %v850 = vpop.f32.mrf.mxu0
        %851 = vdwg.mxu0
        %v852 = vmul.f32 %v713, 0.35355338
        %v853 = vpack.c.bf16 %v852, %v852
        %v854 = vpack.c.bf16 %v780, %v780
        %v855 = vpack.c.bf16 %v847, %v847
        %vm856 = vcmask 64512
        %v858 = vsel %vm856, %v853, 0
        %v861 = vsel %vm856, %v854, 0
        %863 = vmatprep.subr.bf16.mxu0 0
        %864 = vmatpush1.bf16.xpose.msra.mxu0 0
        %865 = vmatprep.subr.bf16.mxu0 0
        %866 = vmatpush1.bf16.xpose.msra.mxu0 0
        %867 = vmatprep.subr.bf16.mxu0 0
        %868 = vmatpush1.bf16.xpose.msra.mxu0 0
        %869 = vmatprep.subr.bf16.mxu0 0
        %870 = vmatpush1.bf16.xpose.msra.mxu0 0
        %871 = vmatprep.subr.bf16.mxu0 0
        %872 = vmatpush1.bf16.xpose.msra.mxu0 0
        %873 = vmatprep.subr.bf16.mxu0 0
        %874 = vmatpush1.bf16.xpose.msra.mxu0 0
        %875 = vmatprep.subr.bf16.mxu0 0
        %876 = vmatpush1.bf16.xpose.msra.mxu0 0
        %877 = vmatprep.subr.bf16.mxu0 0
        %878 = vmatpush1.bf16.xpose.msra.mxu0 %v861
        %879 = vmatprep.subr.bf16.mxu0 0
        %880 = vmatpush2.bf16.xpose.msra.mxu0 0
        %881 = vmatprep.subr.bf16.mxu0 0
        %882 = vmatpush2.bf16.xpose.msra.mxu0 0
        %883 = vmatprep.subr.bf16.mxu0 0
        %884 = vmatpush2.bf16.xpose.msra.mxu0 0
        %885 = vmatprep.subr.bf16.mxu0 0
        %886 = vmatpush2.bf16.xpose.msra.mxu0 0
        %887 = vmatprep.subr.bf16.mxu0 0
        %888 = vmatpush2.bf16.xpose.msra.mxu0 0
        %889 = vmatprep.subr.bf16.mxu0 0
        %890 = vmatpush2.bf16.xpose.msra.mxu0 0
        %891 = vmatprep.subr.bf16.mxu0 0
        %892 = vmatpush2.bf16.xpose.msra.mxu0 0
        %893 = vmatprep.subr.bf16.mxu0 0
        %894 = vmatpush2.bf16.xpose.msra.mxu0 0
        %895 = vmatprep.mubr.bf16.mxu0 0
        %896 = vmatmul.mubr.bf16.gmra.mxu0 %v858
        %v897 = vpop.f32.mrf.mxu0
        %v898 = vadd.f32 0.0, %v897
        %v899 = vpop.f32.mrf.mxu0
        %v900 = vpop.f32.mrf.mxu0
        %v901 = vpop.f32.mrf.mxu0
        %902 = vdwg.mxu0
        %v903 = vsel %vm856, %v898, -inf
        %904 = vmax.xlane.f32.xlu0 %v903
        %v905 = vpop.xlane.xlu0 %904
        %v906 = vsub.f32 %v898, %v905
        %v907 = vmul.f32 %v906, 1.442695
        %v908 = vpow.pop %v907
        %v909 = vsel %vm856, %v908, 0.0
        %910 = vadd.xlane.f32.xlu0 %v909
        %v911 = vpop.xlane.xlu0 %910
        %v912 = vrcp.pop %v911
        %v913 = vmul.f32 %v908, %v912
        %v914 = vpack.c.bf16 %v913, %v913
        %v916 = vsel %vm856, %v914, 0
        %vm918 = vcmask 1043456
        %v920 = vsel %vm918, %v855, 0
        %922 = vmatprep.subr.bf16.mxu0 0
        %923 = vmatpush1.bf16.msra.mxu0 0
        %924 = vmatprep.subr.bf16.mxu0 0
        %925 = vmatpush1.bf16.msra.mxu0 0
        %926 = vmatprep.subr.bf16.mxu0 0
        %927 = vmatpush1.bf16.msra.mxu0 0
        %928 = vmatprep.subr.bf16.mxu0 0
        %929 = vmatpush1.bf16.msra.mxu0 0
        %930 = vmatprep.subr.bf16.mxu0 0
        %931 = vmatpush1.bf16.msra.mxu0 0
        %932 = vmatprep.subr.bf16.mxu0 0
        %933 = vmatpush1.bf16.msra.mxu0 0
        %934 = vmatprep.subr.bf16.mxu0 0
        %935 = vmatpush1.bf16.msra.mxu0 0
        %936 = vmatprep.subr.bf16.mxu0 0
        %937 = vmatpush1.bf16.msra.mxu0 %v920
        %938 = vmatprep.subr.bf16.mxu0 0
        %939 = vmatpush2.bf16.msra.mxu0 0
        %940 = vmatprep.subr.bf16.mxu0 0
        %941 = vmatpush2.bf16.msra.mxu0 0
        %942 = vmatprep.subr.bf16.mxu0 0
        %943 = vmatpush2.bf16.msra.mxu0 0
        %944 = vmatprep.subr.bf16.mxu0 0
        %945 = vmatpush2.bf16.msra.mxu0 0
        %946 = vmatprep.subr.bf16.mxu0 0
        %947 = vmatpush2.bf16.msra.mxu0 0
        %948 = vmatprep.subr.bf16.mxu0 0
        %949 = vmatpush2.bf16.msra.mxu0 0
        %950 = vmatprep.subr.bf16.mxu0 0
        %951 = vmatpush2.bf16.msra.mxu0 0
        %952 = vmatprep.subr.bf16.mxu0 0
        %953 = vmatpush2.bf16.msra.mxu0 0
        %954 = vmatprep.mubr.bf16.mxu0 0
        %955 = vmatmul.mubr.bf16.gmra.mxu0 %v916
        %v956 = vpop.f32.mrf.mxu0
        %v957 = vadd.f32 0.0, %v956
        %v958 = vpop.f32.mrf.mxu0
        %v959 = vpop.f32.mrf.mxu0
        %v960 = vpop.f32.mrf.mxu0
        %961 = vdwg.mxu0
        %v962 = vpack.c.bf16 %v957, %v957
        %v963 = vld [vmem:[%s9] sm:$0xf]
        %965 = vrot.lane.b32.xlu0 %v853, 120
        %v966 = vpop.permute.xlu0 %965
        %968 = vrot.lane.b32.xlu0 %v854, 120
        %v969 = vpop.permute.xlu0 %968
        %v971 = vsel %vm856, %v966, 0
        %v974 = vsel %vm856, %v969, 0
        %976 = vmatprep.subr.bf16.mxu0 0
        %977 = vmatpush1.bf16.xpose.msra.mxu0 0
        %978 = vmatprep.subr.bf16.mxu0 0
        %979 = vmatpush1.bf16.xpose.msra.mxu0 0
        %980 = vmatprep.subr.bf16.mxu0 0
        %981 = vmatpush1.bf16.xpose.msra.mxu0 0
        %982 = vmatprep.subr.bf16.mxu0 0
        %983 = vmatpush1.bf16.xpose.msra.mxu0 0
        %984 = vmatprep.subr.bf16.mxu0 0
        %985 = vmatpush1.bf16.xpose.msra.mxu0 0
        %986 = vmatprep.subr.bf16.mxu0 0
        %987 = vmatpush1.bf16.xpose.msra.mxu0 0
        %988 = vmatprep.subr.bf16.mxu0 0
        %989 = vmatpush1.bf16.xpose.msra.mxu0 0
        %990 = vmatprep.subr.bf16.mxu0 0
        %991 = vmatpush1.bf16.xpose.msra.mxu0 %v974
        %992 = vmatprep.subr.bf16.mxu0 0
        %993 = vmatpush2.bf16.xpose.msra.mxu0 0
        %994 = vmatprep.subr.bf16.mxu0 0
        %995 = vmatpush2.bf16.xpose.msra.mxu0 0
        %996 = vmatprep.subr.bf16.mxu0 0
        %997 = vmatpush2.bf16.xpose.msra.mxu0 0
        %998 = vmatprep.subr.bf16.mxu0 0
        %999 = vmatpush2.bf16.xpose.msra.mxu0 0
        %1000 = vmatprep.subr.bf16.mxu0 0
        %1001 = vmatpush2.bf16.xpose.msra.mxu0 0
        %1002 = vmatprep.subr.bf16.mxu0 0
        %1003 = vmatpush2.bf16.xpose.msra.mxu0 0
        %1004 = vmatprep.subr.bf16.mxu0 0
        %1005 = vmatpush2.bf16.xpose.msra.mxu0 0
        %1006 = vmatprep.subr.bf16.mxu0 0
        %1007 = vmatpush2.bf16.xpose.msra.mxu0 0
        %1008 = vmatprep.mubr.bf16.mxu0 0
        %1009 = vmatmul.mubr.bf16.gmra.mxu0 %v971
        %v1010 = vpop.f32.mrf.mxu0
        %v1011 = vadd.f32 0.0, %v1010
        %v1012 = vpop.f32.mrf.mxu0
        %v1013 = vpop.f32.mrf.mxu0
        %v1014 = vpop.f32.mrf.mxu0
        %1015 = vdwg.mxu0
        %v1016 = vsel %vm856, %v1011, -inf
        %1017 = vmax.xlane.f32.xlu0 %v1016
        %v1018 = vpop.xlane.xlu0 %1017
        %v1019 = vsub.f32 %v1011, %v1018
        %v1020 = vmul.f32 %v1019, 1.442695
        %v1021 = vpow.pop %v1020
        %v1022 = vsel %vm856, %v1021, 0.0
        %1023 = vadd.xlane.f32.xlu0 %v1022
        %v1024 = vpop.xlane.xlu0 %1023
        %v1025 = vrcp.pop %v1024
        %v1026 = vmul.f32 %v1021, %v1025
        %v1027 = vpack.c.bf16 %v1026, %v1026
        %1029 = vrot.lane.b32.xlu0 %v855, 120
        %v1030 = vpop.permute.xlu0 %1029
        %v1032 = vsel %vm856, %v1027, 0
        %v1035 = vsel %vm918, %v1030, 0
        %1037 = vmatprep.subr.bf16.mxu0 0
        %1038 = vmatpush1.bf16.msra.mxu0 0
        %1039 = vmatprep.subr.bf16.mxu0 0
        %1040 = vmatpush1.bf16.msra.mxu0 0
        %1041 = vmatprep.subr.bf16.mxu0 0
        %1042 = vmatpush1.bf16.msra.mxu0 0
        %1043 = vmatprep.subr.bf16.mxu0 0
        %1044 = vmatpush1.bf16.msra.mxu0 0
        %1045 = vmatprep.subr.bf16.mxu0 0
        %1046 = vmatpush1.bf16.msra.mxu0 0
        %1047 = vmatprep.subr.bf16.mxu0 0
        %1048 = vmatpush1.bf16.msra.mxu0 0
        %1049 = vmatprep.subr.bf16.mxu0 0
        %1050 = vmatpush1.bf16.msra.mxu0 0
        %1051 = vmatprep.subr.bf16.mxu0 0
        %1052 = vmatpush1.bf16.msra.mxu0 %v1035
        %1053 = vmatprep.subr.bf16.mxu0 0
        %1054 = vmatpush2.bf16.msra.mxu0 0
        %1055 = vmatprep.subr.bf16.mxu0 0
        %1056 = vmatpush2.bf16.msra.mxu0 0
        %1057 = vmatprep.subr.bf16.mxu0 0
        %1058 = vmatpush2.bf16.msra.mxu0 0
        %1059 = vmatprep.subr.bf16.mxu0 0
        %1060 = vmatpush2.bf16.msra.mxu0 0
        %1061 = vmatprep.subr.bf16.mxu0 0
        %1062 = vmatpush2.bf16.msra.mxu0 0
        %1063 = vmatprep.subr.bf16.mxu0 0
        %1064 = vmatpush2.bf16.msra.mxu0 0
        %1065 = vmatprep.subr.bf16.mxu0 0
        %1066 = vmatpush2.bf16.msra.mxu0 0
        %1067 = vmatprep.subr.bf16.mxu0 0
        %1068 = vmatpush2.bf16.msra.mxu0 0
        %1069 = vmatprep.mubr.bf16.mxu0 0
        %1070 = vmatmul.mubr.bf16.gmra.mxu0 %v1032
        %v1071 = vpop.f32.mrf.mxu0
        %v1072 = vadd.f32 0.0, %v1071
        %v1073 = vpop.f32.mrf.mxu0
        %v1074 = vpop.f32.mrf.mxu0
        %v1075 = vpop.f32.mrf.mxu0
        %1076 = vdwg.mxu0
        %v1077 = vpack.c.bf16 %v1072, %v1072
        %v1078 = vld [vmem:[%s9 + $0x4] sm:$0xf]
        %v1080 = vsel %vm856, %v1077, 0
        %v1083 = vsel %vm918, %v1078, 0
        %1085 = vmatprep.subr.bf16.mxu0 0
        %1086 = vmatpush1.bf16.msra.mxu0 0
        %1087 = vmatprep.subr.bf16.mxu0 0
        %1088 = vmatpush1.bf16.msra.mxu0 0
        %1089 = vmatprep.subr.bf16.mxu0 0
        %1090 = vmatpush1.bf16.msra.mxu0 0
        %1091 = vmatprep.subr.bf16.mxu0 0
        %1092 = vmatpush1.bf16.msra.mxu0 0
        %1093 = vmatprep.subr.bf16.mxu0 0
        %1094 = vmatpush1.bf16.msra.mxu0 0
        %1095 = vmatprep.subr.bf16.mxu0 0
        %1096 = vmatpush1.bf16.msra.mxu0 0
        %1097 = vmatprep.subr.bf16.mxu0 0
        %1098 = vmatpush1.bf16.msra.mxu0 0
        %1099 = vmatprep.subr.bf16.mxu0 0
        %1100 = vmatpush1.bf16.msra.mxu0 %v1083
        %1101 = vmatprep.subr.bf16.mxu0 0
        %1102 = vmatpush2.bf16.msra.mxu0 0
        %1103 = vmatprep.subr.bf16.mxu0 0
        %1104 = vmatpush2.bf16.msra.mxu0 0
        %1105 = vmatprep.subr.bf16.mxu0 0
        %1106 = vmatpush2.bf16.msra.mxu0 0
        %1107 = vmatprep.subr.bf16.mxu0 0
        %1108 = vmatpush2.bf16.msra.mxu0 0
        %1109 = vmatprep.subr.bf16.mxu0 0
        %1110 = vmatpush2.bf16.msra.mxu0 0
        %1111 = vmatprep.subr.bf16.mxu0 0
        %1112 = vmatpush2.bf16.msra.mxu0 0
        %1113 = vmatprep.subr.bf16.mxu0 0
        %1114 = vmatpush2.bf16.msra.mxu0 0
        %1115 = vmatprep.subr.bf16.mxu0 0
        %1116 = vmatpush2.bf16.msra.mxu0 0
        %1117 = vmatprep.mubr.bf16.mxu0 0
        %1118 = vmatmul.mubr.bf16.gmra.mxu0 %v1080
        %v1119 = vpop.f32.mrf.mxu0
        %v1120 = vadd.f32 0.0, %v1119
        %v1121 = vpop.f32.mrf.mxu0
        %v1122 = vpop.f32.mrf.mxu0
        %v1123 = vpop.f32.mrf.mxu0
        %1124 = vdwg.mxu0
        %v1126 = vsel %vm856, %v962, 0
        %v1129 = vsel %vm918, %v963, 0
        %1131 = vmatprep.subr.bf16.mxu0 0
        %1132 = vmatpush1.bf16.msra.mxu0 0
        %1133 = vmatprep.subr.bf16.mxu0 0
        %1134 = vmatpush1.bf16.msra.mxu0 0
        %1135 = vmatprep.subr.bf16.mxu0 0
        %1136 = vmatpush1.bf16.msra.mxu0 0
        %1137 = vmatprep.subr.bf16.mxu0 0
        %1138 = vmatpush1.bf16.msra.mxu0 0
        %1139 = vmatprep.subr.bf16.mxu0 0
        %1140 = vmatpush1.bf16.msra.mxu0 0
        %1141 = vmatprep.subr.bf16.mxu0 0
        %1142 = vmatpush1.bf16.msra.mxu0 0
        %1143 = vmatprep.subr.bf16.mxu0 0
        %1144 = vmatpush1.bf16.msra.mxu0 0
        %1145 = vmatprep.subr.bf16.mxu0 0
        %1146 = vmatpush1.bf16.msra.mxu0 %v1129
        %1147 = vmatprep.subr.bf16.mxu0 0
        %1148 = vmatpush2.bf16.msra.mxu0 0
        %1149 = vmatprep.subr.bf16.mxu0 0
        %1150 = vmatpush2.bf16.msra.mxu0 0
        %1151 = vmatprep.subr.bf16.mxu0 0
        %1152 = vmatpush2.bf16.msra.mxu0 0
        %1153 = vmatprep.subr.bf16.mxu0 0
        %1154 = vmatpush2.bf16.msra.mxu0 0
        %1155 = vmatprep.subr.bf16.mxu0 0
        %1156 = vmatpush2.bf16.msra.mxu0 0
        %1157 = vmatprep.subr.bf16.mxu0 0
        %1158 = vmatpush2.bf16.msra.mxu0 0
        %1159 = vmatprep.subr.bf16.mxu0 0
        %1160 = vmatpush2.bf16.msra.mxu0 0
        %1161 = vmatprep.subr.bf16.mxu0 0
        %1162 = vmatpush2.bf16.msra.mxu0 0
        %1163 = vmatprep.mubr.bf16.mxu0 0
        %1164 = vmatmul.mubr.bf16.gmra.mxu0 %v1126
        %v1165 = vpop.f32.mrf.mxu0
        %v1166 = vadd.f32 %v1120, %v1165
        %v1167 = vpop.f32.mrf.mxu0
        %v1168 = vpop.f32.mrf.mxu0
        %v1169 = vpop.f32.mrf.mxu0
        %1170 = vdwg.mxu0
        %1171 = vrot.lane.b32.xlu0 %v853, 112
        %v1172 = vpop.permute.xlu0 %1171
        %1173 = vrot.lane.b32.xlu0 %v854, 112
        %v1174 = vpop.permute.xlu0 %1173
        %v1176 = vsel %vm856, %v1172, 0
        %v1179 = vsel %vm856, %v1174, 0
        %1181 = vmatprep.subr.bf16.mxu0 0
        %1182 = vmatpush1.bf16.xpose.msra.mxu0 0
        %1183 = vmatprep.subr.bf16.mxu0 0
        %1184 = vmatpush1.bf16.xpose.msra.mxu0 0
        %1185 = vmatprep.subr.bf16.mxu0 0
        %1186 = vmatpush1.bf16.xpose.msra.mxu0 0
        %1187 = vmatprep.subr.bf16.mxu0 0
        %1188 = vmatpush1.bf16.xpose.msra.mxu0 0
        %1189 = vmatprep.subr.bf16.mxu0 0
        %1190 = vmatpush1.bf16.xpose.msra.mxu0 0
        %1191 = vmatprep.subr.bf16.mxu0 0
        %1192 = vmatpush1.bf16.xpose.msra.mxu0 0
        %1193 = vmatprep.subr.bf16.mxu0 0
        %1194 = vmatpush1.bf16.xpose.msra.mxu0 0
        %1195 = vmatprep.subr.bf16.mxu0 0
        %1196 = vmatpush1.bf16.xpose.msra.mxu0 %v1179
        %1197 = vmatprep.subr.bf16.mxu0 0
        %1198 = vmatpush2.bf16.xpose.msra.mxu0 0
        %1199 = vmatprep.subr.bf16.mxu0 0
        %1200 = vmatpush2.bf16.xpose.msra.mxu0 0
        %1201 = vmatprep.subr.bf16.mxu0 0
        %1202 = vmatpush2.bf16.xpose.msra.mxu0 0
        %1203 = vmatprep.subr.bf16.mxu0 0
        %1204 = vmatpush2.bf16.xpose.msra.mxu0 0
        %1205 = vmatprep.subr.bf16.mxu0 0
        %1206 = vmatpush2.bf16.xpose.msra.mxu0 0
        %1207 = vmatprep.subr.bf16.mxu0 0
        %1208 = vmatpush2.bf16.xpose.msra.mxu0 0
        %1209 = vmatprep.subr.bf16.mxu0 0
        %1210 = vmatpush2.bf16.xpose.msra.mxu0 0
        %1211 = vmatprep.subr.bf16.mxu0 0
        %1212 = vmatpush2.bf16.xpose.msra.mxu0 0
        %1213 = vmatprep.mubr.bf16.mxu0 0
        %1214 = vmatmul.mubr.bf16.gmra.mxu0 %v1176
        %v1215 = vpop.f32.mrf.mxu0
        %v1216 = vadd.f32 0.0, %v1215
        %v1217 = vpop.f32.mrf.mxu0
        %v1218 = vpop.f32.mrf.mxu0
        %v1219 = vpop.f32.mrf.mxu0
        %1220 = vdwg.mxu0
        %v1221 = vsel %vm856, %v1216, -inf
        %1222 = vmax.xlane.f32.xlu0 %v1221
        %v1223 = vpop.xlane.xlu0 %1222
        %v1224 = vsub.f32 %v1216, %v1223
        %v1225 = vmul.f32 %v1224, 1.442695
        %v1226 = vpow.pop %v1225
        %v1227 = vsel %vm856, %v1226, 0.0
        %1228 = vadd.xlane.f32.xlu0 %v1227
        %v1229 = vpop.xlane.xlu0 %1228
        %v1230 = vrcp.pop %v1229
        %v1231 = vmul.f32 %v1226, %v1230
        %v1232 = vpack.c.bf16 %v1231, %v1231
        %1233 = vrot.lane.b32.xlu0 %v855, 112
        %v1234 = vpop.permute.xlu0 %1233
        %v1236 = vsel %vm856, %v1232, 0
        %v1239 = vsel %vm918, %v1234, 0
        %1241 = vmatprep.subr.bf16.mxu0 0
        %1242 = vmatpush1.bf16.msra.mxu0 0
        %1243 = vmatprep.subr.bf16.mxu0 0
        %1244 = vmatpush1.bf16.msra.mxu0 0
        %1245 = vmatprep.subr.bf16.mxu0 0
        %1246 = vmatpush1.bf16.msra.mxu0 0
        %1247 = vmatprep.subr.bf16.mxu0 0
        %1248 = vmatpush1.bf16.msra.mxu0 0
        %1249 = vmatprep.subr.bf16.mxu0 0
        %1250 = vmatpush1.bf16.msra.mxu0 0
        %1251 = vmatprep.subr.bf16.mxu0 0
        %1252 = vmatpush1.bf16.msra.mxu0 0
        %1253 = vmatprep.subr.bf16.mxu0 0
        %1254 = vmatpush1.bf16.msra.mxu0 0
        %1255 = vmatprep.subr.bf16.mxu0 0
        %1256 = vmatpush1.bf16.msra.mxu0 %v1239
        %1257 = vmatprep.subr.bf16.mxu0 0
        %1258 = vmatpush2.bf16.msra.mxu0 0
        %1259 = vmatprep.subr.bf16.mxu0 0
        %1260 = vmatpush2.bf16.msra.mxu0 0
        %1261 = vmatprep.subr.bf16.mxu0 0
        %1262 = vmatpush2.bf16.msra.mxu0 0
        %1263 = vmatprep.subr.bf16.mxu0 0
        %1264 = vmatpush2.bf16.msra.mxu0 0
        %1265 = vmatprep.subr.bf16.mxu0 0
        %1266 = vmatpush2.bf16.msra.mxu0 0
        %1267 = vmatprep.subr.bf16.mxu0 0
        %1268 = vmatpush2.bf16.msra.mxu0 0
        %1269 = vmatprep.subr.bf16.mxu0 0
        %1270 = vmatpush2.bf16.msra.mxu0 0
        %1271 = vmatprep.subr.bf16.mxu0 0
        %1272 = vmatpush2.bf16.msra.mxu0 0
        %1273 = vmatprep.mubr.bf16.mxu0 0
        %1274 = vmatmul.mubr.bf16.gmra.mxu0 %v1236
        %v1275 = vpop.f32.mrf.mxu0
        %v1276 = vadd.f32 0.0, %v1275
        %v1277 = vpop.f32.mrf.mxu0
        %v1278 = vpop.f32.mrf.mxu0
        %v1279 = vpop.f32.mrf.mxu0
        %1280 = vdwg.mxu0
        %v1281 = vpack.c.bf16 %v1276, %v1276
        %v1282 = vld [vmem:[%s9 + $0x8] sm:$0xf]
        %v1284 = vsel %vm856, %v1281, 0
        %v1287 = vsel %vm918, %v1282, 0
        %1289 = vmatprep.subr.bf16.mxu0 0
        %1290 = vmatpush1.bf16.msra.mxu0 0
        %1291 = vmatprep.subr.bf16.mxu0 0
        %1292 = vmatpush1.bf16.msra.mxu0 0
        %1293 = vmatprep.subr.bf16.mxu0 0
        %1294 = vmatpush1.bf16.msra.mxu0 0
        %1295 = vmatprep.subr.bf16.mxu0 0
        %1296 = vmatpush1.bf16.msra.mxu0 0
        %1297 = vmatprep.subr.bf16.mxu0 0
        %1298 = vmatpush1.bf16.msra.mxu0 0
        %1299 = vmatprep.subr.bf16.mxu0 0
        %1300 = vmatpush1.bf16.msra.mxu0 0
        %1301 = vmatprep.subr.bf16.mxu0 0
        %1302 = vmatpush1.bf16.msra.mxu0 0
        %1303 = vmatprep.subr.bf16.mxu0 0
        %1304 = vmatpush1.bf16.msra.mxu0 %v1287
        %1305 = vmatprep.subr.bf16.mxu0 0
        %1306 = vmatpush2.bf16.msra.mxu0 0
        %1307 = vmatprep.subr.bf16.mxu0 0
        %1308 = vmatpush2.bf16.msra.mxu0 0
        %1309 = vmatprep.subr.bf16.mxu0 0
        %1310 = vmatpush2.bf16.msra.mxu0 0
        %1311 = vmatprep.subr.bf16.mxu0 0
        %1312 = vmatpush2.bf16.msra.mxu0 0
        %1313 = vmatprep.subr.bf16.mxu0 0
        %1314 = vmatpush2.bf16.msra.mxu0 0
        %1315 = vmatprep.subr.bf16.mxu0 0
        %1316 = vmatpush2.bf16.msra.mxu0 0
        %1317 = vmatprep.subr.bf16.mxu0 0
        %1318 = vmatpush2.bf16.msra.mxu0 0
        %1319 = vmatprep.subr.bf16.mxu0 0
        %1320 = vmatpush2.bf16.msra.mxu0 0
        %1321 = vmatprep.mubr.bf16.mxu0 0
        %1322 = vmatmul.mubr.bf16.gmra.mxu0 %v1284
        %v1323 = vpop.f32.mrf.mxu0
        %v1324 = vadd.f32 0.0, %v1323
        %v1325 = vpop.f32.mrf.mxu0
        %v1326 = vpop.f32.mrf.mxu0
        %v1327 = vpop.f32.mrf.mxu0
        %1328 = vdwg.mxu0
        %v1329 = vadd.f32 %v1166, %v1324
        %1330 = vrot.lane.b32.xlu0 %v853, 104
        %v1331 = vpop.permute.xlu0 %1330
        %1332 = vrot.lane.b32.xlu0 %v854, 104
        %v1333 = vpop.permute.xlu0 %1332
        %v1335 = vsel %vm856, %v1331, 0
        %v1338 = vsel %vm856, %v1333, 0
        %1340 = vmatprep.subr.bf16.mxu0 0
        %1341 = vmatpush1.bf16.xpose.msra.mxu0 0
        %1342 = vmatprep.subr.bf16.mxu0 0
        %1343 = vmatpush1.bf16.xpose.msra.mxu0 0
        %1344 = vmatprep.subr.bf16.mxu0 0
        %1345 = vmatpush1.bf16.xpose.msra.mxu0 0
        %1346 = vmatprep.subr.bf16.mxu0 0
        %1347 = vmatpush1.bf16.xpose.msra.mxu0 0
        %1348 = vmatprep.subr.bf16.mxu0 0
        %1349 = vmatpush1.bf16.xpose.msra.mxu0 0
        %1350 = vmatprep.subr.bf16.mxu0 0
        %1351 = vmatpush1.bf16.xpose.msra.mxu0 0
        %1352 = vmatprep.subr.bf16.mxu0 0
        %1353 = vmatpush1.bf16.xpose.msra.mxu0 0
        %1354 = vmatprep.subr.bf16.mxu0 0
        %1355 = vmatpush1.bf16.xpose.msra.mxu0 %v1338
        %1356 = vmatprep.subr.bf16.mxu0 0
        %1357 = vmatpush2.bf16.xpose.msra.mxu0 0
        %1358 = vmatprep.subr.bf16.mxu0 0
        %1359 = vmatpush2.bf16.xpose.msra.mxu0 0
        %1360 = vmatprep.subr.bf16.mxu0 0
        %1361 = vmatpush2.bf16.xpose.msra.mxu0 0
        %1362 = vmatprep.subr.bf16.mxu0 0
        %1363 = vmatpush2.bf16.xpose.msra.mxu0 0
        %1364 = vmatprep.subr.bf16.mxu0 0
        %1365 = vmatpush2.bf16.xpose.msra.mxu0 0
        %1366 = vmatprep.subr.bf16.mxu0 0
        %1367 = vmatpush2.bf16.xpose.msra.mxu0 0
        %1368 = vmatprep.subr.bf16.mxu0 0
        %1369 = vmatpush2.bf16.xpose.msra.mxu0 0
        %1370 = vmatprep.subr.bf16.mxu0 0
        %1371 = vmatpush2.bf16.xpose.msra.mxu0 0
        %1372 = vmatprep.mubr.bf16.mxu0 0
        %1373 = vmatmul.mubr.bf16.gmra.mxu0 %v1335
        %v1374 = vpop.f32.mrf.mxu0
        %v1375 = vadd.f32 0.0, %v1374
        %v1376 = vpop.f32.mrf.mxu0
        %v1377 = vpop.f32.mrf.mxu0
        %v1378 = vpop.f32.mrf.mxu0
        %1379 = vdwg.mxu0
        %v1380 = vsel %vm856, %v1375, -inf
        %1381 = vmax.xlane.f32.xlu0 %v1380
        %v1382 = vpop.xlane.xlu0 %1381
        %v1383 = vsub.f32 %v1375, %v1382
        %v1384 = vmul.f32 %v1383, 1.442695
        %v1385 = vpow.pop %v1384
        %v1386 = vsel %vm856, %v1385, 0.0
        %1387 = vadd.xlane.f32.xlu0 %v1386
        %v1388 = vpop.xlane.xlu0 %1387
        %v1389 = vrcp.pop %v1388
        %v1390 = vmul.f32 %v1385, %v1389
        %v1391 = vpack.c.bf16 %v1390, %v1390
        %1392 = vrot.lane.b32.xlu0 %v855, 104
        %v1393 = vpop.permute.xlu0 %1392
        %v1395 = vsel %vm856, %v1391, 0
        %v1398 = vsel %vm918, %v1393, 0
        %1400 = vmatprep.subr.bf16.mxu0 0
        %1401 = vmatpush1.bf16.msra.mxu0 0
        %1402 = vmatprep.subr.bf16.mxu0 0
        %1403 = vmatpush1.bf16.msra.mxu0 0
        %1404 = vmatprep.subr.bf16.mxu0 0
        %1405 = vmatpush1.bf16.msra.mxu0 0
        %1406 = vmatprep.subr.bf16.mxu0 0
        %1407 = vmatpush1.bf16.msra.mxu0 0
        %1408 = vmatprep.subr.bf16.mxu0 0
        %1409 = vmatpush1.bf16.msra.mxu0 0
        %1410 = vmatprep.subr.bf16.mxu0 0
        %1411 = vmatpush1.bf16.msra.mxu0 0
        %1412 = vmatprep.subr.bf16.mxu0 0
        %1413 = vmatpush1.bf16.msra.mxu0 0
        %1414 = vmatprep.subr.bf16.mxu0 0
        %1415 = vmatpush1.bf16.msra.mxu0 %v1398
        %1416 = vmatprep.subr.bf16.mxu0 0
        %1417 = vmatpush2.bf16.msra.mxu0 0
        %1418 = vmatprep.subr.bf16.mxu0 0
        %1419 = vmatpush2.bf16.msra.mxu0 0
        %1420 = vmatprep.subr.bf16.mxu0 0
        %1421 = vmatpush2.bf16.msra.mxu0 0
        %1422 = vmatprep.subr.bf16.mxu0 0
        %1423 = vmatpush2.bf16.msra.mxu0 0
        %1424 = vmatprep.subr.bf16.mxu0 0
        %1425 = vmatpush2.bf16.msra.mxu0 0
        %1426 = vmatprep.subr.bf16.mxu0 0
        %1427 = vmatpush2.bf16.msra.mxu0 0
        %1428 = vmatprep.subr.bf16.mxu0 0
        %1429 = vmatpush2.bf16.msra.mxu0 0
        %1430 = vmatprep.subr.bf16.mxu0 0
        %1431 = vmatpush2.bf16.msra.mxu0 0
        %1432 = vmatprep.mubr.bf16.mxu0 0
        %1433 = vmatmul.mubr.bf16.gmra.mxu0 %v1395
        %v1434 = vpop.f32.mrf.mxu0
        %v1435 = vadd.f32 0.0, %v1434
        %v1436 = vpop.f32.mrf.mxu0
        %v1437 = vpop.f32.mrf.mxu0
        %v1438 = vpop.f32.mrf.mxu0
        %1439 = vdwg.mxu0
        %v1440 = vpack.c.bf16 %v1435, %v1435
        %v1441 = vld [vmem:[%s9 + $0xc] sm:$0xf]
        %v1443 = vsel %vm856, %v1440, 0
        %v1446 = vsel %vm918, %v1441, 0
        %1448 = vmatprep.subr.bf16.mxu0 0
        %1449 = vmatpush1.bf16.msra.mxu0 0
        %1450 = vmatprep.subr.bf16.mxu0 0
        %1451 = vmatpush1.bf16.msra.mxu0 0
        %1452 = vmatprep.subr.bf16.mxu0 0
        %1453 = vmatpush1.bf16.msra.mxu0 0
        %1454 = vmatprep.subr.bf16.mxu0 0
        %1455 = vmatpush1.bf16.msra.mxu0 0
        %1456 = vmatprep.subr.bf16.mxu0 0
        %1457 = vmatpush1.bf16.msra.mxu0 0
        %1458 = vmatprep.subr.bf16.mxu0 0
        %1459 = vmatpush1.bf16.msra.mxu0 0
        %1460 = vmatprep.subr.bf16.mxu0 0
        %1461 = vmatpush1.bf16.msra.mxu0 0
        %1462 = vmatprep.subr.bf16.mxu0 0
        %1463 = vmatpush1.bf16.msra.mxu0 %v1446
        %1464 = vmatprep.subr.bf16.mxu0 0
        %1465 = vmatpush2.bf16.msra.mxu0 0
        %1466 = vmatprep.subr.bf16.mxu0 0
        %1467 = vmatpush2.bf16.msra.mxu0 0
        %1468 = vmatprep.subr.bf16.mxu0 0
        %1469 = vmatpush2.bf16.msra.mxu0 0
        %1470 = vmatprep.subr.bf16.mxu0 0
        %1471 = vmatpush2.bf16.msra.mxu0 0
        %1472 = vmatprep.subr.bf16.mxu0 0
        %1473 = vmatpush2.bf16.msra.mxu0 0
        %1474 = vmatprep.subr.bf16.mxu0 0
        %1475 = vmatpush2.bf16.msra.mxu0 0
        %1476 = vmatprep.subr.bf16.mxu0 0
        %1477 = vmatpush2.bf16.msra.mxu0 0
        %1478 = vmatprep.subr.bf16.mxu0 0
        %1479 = vmatpush2.bf16.msra.mxu0 0
        %1480 = vmatprep.mubr.bf16.mxu0 0
        %1481 = vmatmul.mubr.bf16.gmra.mxu0 %v1443
        %v1482 = vpop.f32.mrf.mxu0
        %v1483 = vadd.f32 0.0, %v1482
        %v1484 = vpop.f32.mrf.mxu0
        %v1485 = vpop.f32.mrf.mxu0
        %v1486 = vpop.f32.mrf.mxu0
        %1487 = vdwg.mxu0
        %v1488 = vadd.f32 %v1329, %v1483
        %v1489 = vld [vmem:[%s10] sm:$0x1]
        %v1491 = vlaneseq
        %v1492 = vshrl.u32 %v1491, 7
        %v1493 = vsub.s32 0, %v1492
        %v1494 = vrot.slane %v1489, %v1493
        %v1496 = vadd.f32 %v1488, %v1494
        %v1497 = vadd.f32 %v1496, %v647
        %v1498 = vsel %vm674, %v1497, 0.0
        %1499 = vadd.xlane.f32.xlu0 %v1498
        %v1500 = vpop.xlane.xlu0 %1499
        %v1501 = vrcp.pop 32.0
        %v1502 = vmul.f32 %v1500, %v1501
        %v1503 = vsub.f32 %v1497, %v1502
        %v1504 = vmul.f32 %v1503, %v1503
        %v1505 = vsel %vm674, %v1504, 0.0
        %1506 = vadd.xlane.f32.xlu0 %v1505
        %v1507 = vpop.xlane.xlu0 %1506
        %v1508 = vmul.f32 %v1507, %v1501
        %v1509 = vadd.f32 %v1508, 1e-12
        %v1510 = vrsqrt.pop %v1509
        %v1511 = vmul.f32 %v1503, %v1510
        %v1512 = vld [vmem:[%s11] sm:$0x1]
        %v1514 = vlaneseq
        %v1515 = vshrl.u32 %v1514, 7
        %v1516 = vsub.s32 0, %v1515
        %v1517 = vrot.slane %v1512, %v1516
        %v1519 = vmul.f32 %v1511, %v1517
        %v1520 = vld [vmem:[%s12] sm:$0x1]
        %v1522 = vlaneseq
        %v1523 = vshrl.u32 %v1522, 7
        %v1524 = vsub.s32 0, %v1523
        %v1525 = vrot.slane %v1520, %v1524
        %v1527 = vadd.f32 %v1519, %v1525
        %1528 = vst.msk [vmem:[%s638] sm:$0xff] %vm674, %v1527
        %1529 = vst.msk [vmem:[%s645] sm:$0xff] %vm856, %v913
        %1530 = vst.msk [vmem:[%s645 + $0x8] sm:$0xff] %vm856, %v1026
        %1531 = vst.msk [vmem:[%s645 + $0x10] sm:$0xff] %vm856, %v1231
        %1532 = vst.msk [vmem:[%s645 + $0x18] sm:$0xff] %vm856, %v1390
        %s1533 = sand.u32 %s337, 1
        %s1534 = scalar_lea.sflag [#allocation4], %s1533
        %s1535 = sand.u32 %s337, 1
        %s1536 = smul.addr %s1535, 8
        %s1537 = scalar_lea.vmem [#allocation17], %s1536
        %s1538 = sand.u32 %s363, 1
        %s1539 = scalar_lea.sflag [#allocation19], %s1538
        %s1540 = sand.u32 %s363, 1
        %s1541 = smul.addr %s1540, 32
        %s1542 = scalar_lea.vmem [#allocation18], %s1541
        // Predicated region
        $region109: #{tpu_custom_call.1} parent=71 // pred_check
          %p1543 = pneg %p347
        $region110: #{tpu_custom_call.1} parent=71 // pred_check_branch
          %1545 = sbr.rel (%p1543) target = $region112
        $region111: #{tpu_custom_call.1} parent=71 // pred_region
          %s1547 = ssub.s32 128, 128
          %1548 = vsyncadd %s1534, %s1547
          %s1549 = smul.addr %s41, 128
          %s1550 = scalar_lea.hbm %s13, %s1549
          %s1552 = sshll.u32 %s1537, 4
          %s1553 = int_to_ptr.vmem [resolvable:$true] %s1552
          %1555 = dma.vmem_to_hbm [thread:$0]  %s1553, 128, %s1550, %s1534
        $region112: #{tpu_custom_call.1} parent=71 // pred_fallthru
          _
        // Predicated region
        $region113: #{tpu_custom_call.1} parent=71 // pred_check
          %p1556 = pneg %p373
        $region114: #{tpu_custom_call.1} parent=71 // pred_check_branch
          %1558 = sbr.rel (%p1556) target = $region116
        $region115: #{tpu_custom_call.1} parent=71 // pred_region
          %s1560 = ssub.s32 512, 512
          %1561 = vsyncadd %s1539, %s1560
          %s1562 = smul.addr %s41, 4
          %s1563 = smul.addr %s1562, 128
          %s1564 = scalar_lea.hbm %s14, %s1563
          %s1565 = sshll.u32 %s1542, 4
          %s1566 = int_to_ptr.vmem [resolvable:$true] %s1565
          %1571 = dma.vmem_to_hbm [thread:$0]  %s1566, 512, %s1564, %s1539, 128, 128, 8
        $region116: #{tpu_custom_call.1} parent=71 // pred_fallthru
          _
      $region72: #{tpu_custom_call.1} parent=5 // pred_fallthru
        _
      %p1572 = scmp.le.s32.totalorder 2, %s36
      // Predicated region
      $region117: #{tpu_custom_call.1} parent=5 // pred_check
        %p1573 = pneg %p1572
      $region118: #{tpu_custom_call.1} parent=5 // pred_check_branch
        %1575 = sbr.rel (%p1573) target = $region120
      $region119: #{tpu_custom_call.1} parent=5 // pred_region
        %s1576 = ssub.s32 %s36, 2
        // Predicated region
        $region121: #{tpu_custom_call.1} parent=119 // pred_check
          %p1577 = pneg %p353
        $region122: #{tpu_custom_call.1} parent=119 // pred_check_branch
          %1579 = sbr.rel (%p1577) target = $region124
        $region123: #{tpu_custom_call.1} parent=119 // pred_region
          %s1580 = sand.u32 %s338, 1
          %s1581 = scalar_lea.sflag [#allocation4], %s1580
          %s1582 = sand.u32 %s338, 1
          %s1583 = smul.addr %s1582, 8
          %s1584 = scalar_lea.vmem [#allocation17], %s1583
          %1585 = dma.done %s1581, 128
        $region124: #{tpu_custom_call.1} parent=119 // pred_fallthru
          _
        // Predicated region
        $region125: #{tpu_custom_call.1} parent=119 // pred_check
          %p1586 = pneg %p379
        $region126: #{tpu_custom_call.1} parent=119 // pred_check_branch
          %1588 = sbr.rel (%p1586) target = $region128
        $region127: #{tpu_custom_call.1} parent=119 // pred_region
          %s1589 = sand.u32 %s364, 1
          %s1590 = scalar_lea.sflag [#allocation19], %s1589
          %s1591 = sand.u32 %s364, 1
          %s1592 = smul.addr %s1591, 32
          %s1593 = scalar_lea.vmem [#allocation18], %s1592
          %1594 = dma.done %s1590, 512
        $region128: #{tpu_custom_call.1} parent=119 // pred_fallthru
          _
      $region120: #{tpu_custom_call.1} parent=5 // pred_fallthru
        _
    $region6: #{tpu_custom_call.1} parent=1 // loop_footer
      %s40 = sadd.s32 1, %s36
    $region7: #{tpu_custom_call.1} parent=1 // loop_footer_branch
      %35 = sbr.rel target = $region3
    $region8: #{tpu_custom_call.1} parent=1 // loop_exit
      _
    %1595 = vsyncpa [#allocation3], 1
    %s1596 = scalar_lea.sflag [#allocation3], 1
    %1597 = vsyncpa %s1596, 1
    %1598 = vsyncpa [#allocation6], 1
    %s1599 = scalar_lea.sflag [#allocation6], 1
    %1600 = vsyncpa %s1599, 1
    %1601 = vsyncpa [#allocation9], 1
    %1602 = vsyncpa [#allocation12], 1
    %1603 = vsyncpa [#allocation15], 1
    %1604 = vsyncpa [#allocation4], 1
    %s1605 = scalar_lea.sflag [#allocation4], 1
    %1606 = vsyncpa %s1605, 1
    %1607 = vsyncpa [#allocation19], 1
    %s1608 = scalar_lea.sflag [#allocation19], 1
    %1609 = vsyncpa %s1608, 1

</llo_original>
